<compile_context>
chip_gen: v5e
topology: v5e:2x2
jax: 0.10.0
libtpu: 0.0.40
codegen_flags: <defaults>
</compile_context>

<pallas_src>
import functools

import jax
import jax.numpy as jnp
from jax.experimental import pallas as pl
from jax.experimental.pallas import tpu as pltpu


def _round_up(x, m):
    return ((x + m - 1) // m) * m


def _shift_zero(v, d, axis):
    """out[i] = v[i + d] along `axis`, zero filled at the boundary (d in {-1,0,+1})."""
    if d == 0:
        return v
    zshape = list(v.shape)
    zshape[axis] = 1
    zeros = jnp.zeros(zshape, v.dtype)
    if d < 0:
        body = jax.lax.slice_in_dim(v, 0, v.shape[axis] - 1, axis=axis)
        return jnp.concatenate([zeros, body], axis=axis)
    body = jax.lax.slice_in_dim(v, 1, v.shape[axis], axis=axis)
    return jnp.concatenate([body, zeros], axis=axis)


# ------------------------------ fused kernel ------------------------------- #

def _bottleneck_kernel(xph_ref, w1_ref, b1_ref, w2_ref, b2_ref, w3_ref, b3_ref,
                       *rest, stride, ho, wo, cin, has_ds):
    if has_ds:
        wd_ref, bd_ref, o_ref, o1_ref = rest
    else:
        o_ref, o1_ref = rest

    s = stride
    p_total = s * s
    wd_p = w1_ref.shape[1]          # padded bottleneck width (multiple of 128)
    cout_p = w3_ref.shape[1]        # padded output channels (multiple of 128)
    m2 = ho * wo

    # ---- conv1: 1x1 + bias + ReLU (per-pixel matmul over all stride phases) ----
    xm = xph_ref[0]                                        # (P*Ho*Wo, Cin) bf16
    a1 = jnp.dot(xm, w1_ref[...], preferred_element_type=jnp.float32)
    a1 = jnp.maximum(a1 + b1_ref[...], 0.0)
    # keep conv1 output resident in VMEM, phase-major layout (P, Ho, Wo, WdP)
    o1_ref[...] = a1.reshape(p_total, ho, wo, wd_p)

    # ---- conv2: 3x3 stride-s + bias + ReLU as 9 accumulated in-VMEM dots ----
    acc2 = jnp.zeros((m2, wd_p), jnp.float32)
    for kh in range(3):
        ph = (kh - 1) % s
        di = ((kh - 1) - ph) // s          # shift along Ho (-1 / 0 / +1)
        for kw in range(3):
            pw = (kw - 1) % s
            dj = ((kw - 1) - pw) // s      # shift along Wo (-1 / 0 / +1)
            plane = o1_ref[ph * s + pw]                    # (Ho, Wo, WdP) f32
            tap = _shift_zero(_shift_zero(plane, di, 0), dj, 1)
            tap = tap.reshape(m2, wd_p).astype(jnp.bfloat16)
            acc2 = acc2 + jnp.dot(tap, w2_ref[kh, kw],
                                  preferred_element_type=jnp.float32)
    a2 = jnp.maximum(acc2 + b2_ref[...], 0.0).astype(jnp.bfloat16)

    # ---- conv3 (1x1) + downsample residual + final ReLU (fused epilogue) ----
    acc3 = jnp.dot(a2, w3_ref[...], preferred_element_type=jnp.float32) + b3_ref[...]
    xd = xm[0:m2, :]                 # phase (0,0) rows == stride-s sampled pixels
    if has_ds:
        res = jnp.dot(xd, wd_ref[...], preferred_element_type=jnp.float32) + bd_ref[...]
    else:
        # identity shortcut (wrapper asserts stride == 1 and Cin == Cout)
        res = jnp.pad(xd.astype(jnp.float32), ((0, 0), (0, cout_p - cin)))
    out = jnp.maximum(acc3 + res, 0.0)
    o_ref[0] = out.reshape(ho, wo, cout_p)


# --------------------------------- wrapper --------------------------------- #

def quant_bottleneck_forward(x_nchw, params, stride):
    """QuantBottleneck.forward in the default quant state (no quantization active)."""
    # TODO(synk): act_quantizer / weight fake-quant paths (set_quant_state(True, ...))
    # are inactive by default and are not implemented here.
    n, cin, h, w = x_nchw.shape
    s = int(stride)
    assert h % s == 0 and w % s == 0, "spatial dims must be divisible by the stride"
    ho, wo = h // s, w // s
    p_total = s * s

    w1, b1 = params["w1"], params["b1"]          # (width, Cin, 1, 1), (width,)
    w2, b2 = params["w2"], params["b2"]          # (width, width, 3, 3), (width,)
    w3, b3 = params["w3"], params["b3"]          # (Cout, width, 1, 1), (Cout,)
    width = w1.shape[0]
    cout = w3.shape[0]
    has_ds = params.get("wd") is not None
    if not has_ds:
        assert s == 1 and cin == cout, "identity shortcut needs stride==1 and Cin==Cout"

    wd_p = _round_up(width, 128)     # lane-dense bottleneck width
    cout_p = _round_up(cout, 128)    # lane-dense output channels

    # Phase-split (space-to-depth by stride) fused with the mandatory NCHW->NHWC
    # transpose: (N, Cin, H, W) -> (N, s*s*Ho*Wo, Cin), phase-major rows.  All
    # 3x3 stride-s taps then become contiguous shifted planes, and rows
    # [0, Ho*Wo) are exactly the pixels the 1x1 stride-s downsample samples.
    xph = x_nchw.reshape(n, cin, ho, s, wo, s).transpose(0, 3, 5, 2, 4, 1)
    xph = xph.reshape(n, p_total * ho * wo, cin).astype(jnp.bfloat16)

    def padw(a, shape):
        return jnp.pad(a, [(0, t - d) for d, t in zip(a.shape, shape)])

    w1m = padw(w1[:, :, 0, 0].T, (cin, wd_p)).astype(jnp.bfloat16)
    b1p = padw(b1, (wd_p,)).reshape(1, wd_p).astype(jnp.float32)
    w2t = padw(jnp.transpose(w2, (2, 3, 1, 0)), (3, 3, wd_p, wd_p)).astype(jnp.bfloat16)
    b2p = padw(b2, (wd_p,)).reshape(1, wd_p).astype(jnp.float32)
    w3m = padw(w3[:, :, 0, 0].T, (wd_p, cout_p)).astype(jnp.bfloat16)
    b3p = padw(b3, (cout_p,)).reshape(1, cout_p).astype(jnp.float32)

    operands = [xph, w1m, b1p, w2t, b2p, w3m, b3p]
    in_specs = [
        pl.BlockSpec((1, p_total * ho * wo, cin), lambda b: (b, 0, 0)),
        pl.BlockSpec((cin, wd_p), lambda b: (0, 0)),
        pl.BlockSpec((1, wd_p), lambda b: (0, 0)),
        pl.BlockSpec((3, 3, wd_p, wd_p), lambda b: (0, 0, 0, 0)),
        pl.BlockSpec((1, wd_p), lambda b: (0, 0)),
        pl.BlockSpec((wd_p, cout_p), lambda b: (0, 0)),
        pl.BlockSpec((1, cout_p), lambda b: (0, 0)),
    ]
    flops = 2 * n * ho * wo * (p_total * cin * wd_p + 9 * wd_p * wd_p + wd_p * cout_p)
    if has_ds:
        wdm = padw(params["wd"][:, :, 0, 0].T, (cin, cout_p)).astype(jnp.bfloat16)
        bdp = padw(params["bd"], (cout_p,)).reshape(1, cout_p).astype(jnp.float32)
        operands += [wdm, bdp]
        in_specs += [pl.BlockSpec((cin, cout_p), lambda b: (0, 0)),
                     pl.BlockSpec((1, cout_p), lambda b: (0, 0))]
        flops += 2 * n * ho * wo * cin * cout_p

    bytes_accessed = sum(int(a.size) * a.dtype.itemsize for a in operands)
    bytes_accessed += n * ho * wo * cout_p * 4

    kernel = functools.partial(_bottleneck_kernel, stride=s, ho=ho, wo=wo,
                               cin=cin, has_ds=has_ds)
    out = pl.pallas_call(
        kernel,
        out_shape=jax.ShapeDtypeStruct((n, ho, wo, cout_p), jnp.float32),
        grid_spec=pltpu.PrefetchScalarGridSpec(
            num_scalar_prefetch=0,
            grid=(n,),
            in_specs=in_specs,
            out_specs=pl.BlockSpec((1, ho, wo, cout_p), lambda b: (b, 0, 0, 0)),
            scratch_shapes=[pltpu.VMEM((p_total, ho, wo, wd_p), jnp.float32)],
        ),
        compiler_params=pltpu.CompilerParams(
            dimension_semantics=("parallel",)),
        cost_estimate=pl.CostEstimate(flops=int(flops), transcendentals=0,
                                      bytes_accessed=int(bytes_accessed)),
    )(*operands)

    # back to PyTorch NCHW, dropping the lane padding
    return jnp.transpose(out[..., :cout], (0, 3, 1, 2))


# --------------------------- reference (for check) -------------------------- #

def _ref_forward(x_nchw, params, stride):
    x = jnp.transpose(x_nchw, (0, 2, 3, 1)).astype(jnp.float32)
    dn = ("NHWC", "HWIO", "NHWC")

    def conv(inp, w, b, s, pad):
        whwio = jnp.transpose(w, (2, 3, 1, 0))
        out = jax.lax.conv_general_dilated(
            inp, whwio, window_strides=(s, s), padding=pad, dimension_numbers=dn)
        return out + b.reshape(1, 1, 1, -1)

    o = jnp.maximum(conv(x, params["w1"], params["b1"], 1, "VALID"), 0.0)
    o = jnp.maximum(conv(o, params["w2"], params["b2"], stride, ((1, 1), (1, 1))), 0.0)
    o = conv(o, params["w3"], params["b3"], 1, "VALID")
    if params.get("wd") is not None:
        r = conv(x, params["wd"], params["bd"], stride, "VALID")
    else:
        r = x
    out = jnp.maximum(o + r, 0.0)
    return jnp.transpose(out, (0, 3, 1, 2))


# ---------------------------------- main ------------------------------------ #

if __name__ == "__main__":
    key = jax.random.PRNGKey(0)
    # Small bottleneck with a downsample branch (first block of a ResNet stage):
    # Cin=16, width=8, Cout=32, spatial 16x16, stride 2.
    N, Cin, H, W = 2, 16, 16, 16
    width, Cout, stride = 8, 32, 2

    ks = jax.random.split(key, 9)
    params = {
        "w1": 0.1 * jax.random.normal(ks[0], (width, Cin, 1, 1), jnp.float32),
        "b1": 0.1 * jax.random.normal(ks[1], (width,), jnp.float32),
        "w2": 0.1 * jax.random.normal(ks[2], (width, width, 3, 3), jnp.float32),
        "b2": 0.1 * jax.random.normal(ks[3], (width,), jnp.float32),
        "w3": 0.1 * jax.random.normal(ks[4], (Cout, width, 1, 1), jnp.float32),
        "b3": 0.1 * jax.random.normal(ks[5], (Cout,), jnp.float32),
        "wd": 0.1 * jax.random.normal(ks[6], (Cout, Cin, 1, 1), jnp.float32),
        "bd": 0.1 * jax.random.normal(ks[7], (Cout,), jnp.float32),
    }
    x = jax.random.normal(ks[8], (N, Cin, H, W), jnp.float32)

    out = jax.block_until_ready(quant_bottleneck_forward(x, params, stride))
    assert out.shape == (N, Cout, H // stride, W // stride), out.shape

    ref = jax.block_until_ready(_ref_forward(x, params, stride))
    err = float(jnp.max(jnp.abs(out - ref)))
    assert err < 5e-2, f"max abs error {err}"   # bf16 MXU inputs, f32 accumulation

    print("KERNEL_OK")
</pallas_src>

<mosaic_0001>
module attributes {stable_mosaic.version = 11 : i64} {
  func.func @_bottleneck_kernel(%arg0: i32, %arg1: memref<1x256x16xbf16, #tpu.memory_space<vmem>>, %arg2: memref<16x128xbf16, #tpu.memory_space<vmem>>, %arg3: memref<1x128xf32, #tpu.memory_space<vmem>>, %arg4: memref<3x3x128x128xbf16, #tpu.memory_space<vmem>>, %arg5: memref<1x128xf32, #tpu.memory_space<vmem>>, %arg6: memref<128x128xbf16, #tpu.memory_space<vmem>>, %arg7: memref<1x128xf32, #tpu.memory_space<vmem>>, %arg8: memref<16x128xbf16, #tpu.memory_space<vmem>>, %arg9: memref<1x128xf32, #tpu.memory_space<vmem>>, %arg10: memref<1x8x8x128xf32, #tpu.memory_space<vmem>>, %arg11: memref<4x8x8x128xf32, #tpu.memory_space<vmem>>) attributes {dimension_semantics = [#tpu.dimension_semantics<parallel>], iteration_bounds = array<i64: 2>, scalar_prefetch = 0 : i64, scratch_operands = 1 : i64, tpu.core_type = #tpu.core_type<tc>, window_params = [{transform_indices = @transform_0, window_bounds = array<i64: 1, 256, 16>}, {pipeline_mode = #tpu.pipeline_mode<synchronous>, transform_indices = @transform_1, window_bounds = array<i64: 16, 128>}, {pipeline_mode = #tpu.pipeline_mode<synchronous>, transform_indices = @transform_2, window_bounds = array<i64: 1, 128>}, {pipeline_mode = #tpu.pipeline_mode<synchronous>, transform_indices = @transform_3, window_bounds = array<i64: 3, 3, 128, 128>}, {pipeline_mode = #tpu.pipeline_mode<synchronous>, transform_indices = @transform_4, window_bounds = array<i64: 1, 128>}, {pipeline_mode = #tpu.pipeline_mode<synchronous>, transform_indices = @transform_5, window_bounds = array<i64: 128, 128>}, {pipeline_mode = #tpu.pipeline_mode<synchronous>, transform_indices = @transform_6, window_bounds = array<i64: 1, 128>}, {pipeline_mode = #tpu.pipeline_mode<synchronous>, transform_indices = @transform_7, window_bounds = array<i64: 16, 128>}, {pipeline_mode = #tpu.pipeline_mode<synchronous>, transform_indices = @transform_8, window_bounds = array<i64: 1, 128>}, {transform_indices = @transform_9, window_bounds = array<i64: 1, 8, 8, 128>}]} {
    %c0 = arith.constant 0 : index
    %c0_0 = arith.constant 0 : index
    %c0_1 = arith.constant 0 : index
    %0 = vector.load %arg1[%c0, %c0_0, %c0_1] : memref<1x256x16xbf16, #tpu.memory_space<vmem>>, vector<1x256x16xbf16>
    %1 = vector.shape_cast %0 : vector<1x256x16xbf16> to vector<256x16xbf16>
    %c0_2 = arith.constant 0 : index
    %c0_3 = arith.constant 0 : index
    %2 = vector.load %arg2[%c0_2, %c0_3] : memref<16x128xbf16, #tpu.memory_space<vmem>>, vector<16x128xbf16>
    %cst = arith.constant dense<0.000000e+00> : vector<256x128xf32>
    %3 = tpu.matmul %1, %2, %cst {dimension_numbers = #tpu.dot_dimension_numbers<[1], [0], [0], [1], [0, 0, 1, 1], [], []>} : vector<256x16xbf16>, vector<16x128xbf16>, vector<256x128xf32> -> vector<256x128xf32>
    %c0_4 = arith.constant 0 : index
    %c0_5 = arith.constant 0 : index
    %4 = vector.load %arg3[%c0_4, %c0_5] : memref<1x128xf32, #tpu.memory_space<vmem>>, vector<1x128xf32>
    %5 = vector.broadcast %4 : vector<1x128xf32> to vector<256x128xf32>
    %6 = arith.addf %3, %5 : vector<256x128xf32>
    %cst_6 = arith.constant 0.000000e+00 : f32
    %7 = vector.broadcast %cst_6 : f32 to vector<256x128xf32>
    %8 = arith.maximumf %6, %7 : vector<256x128xf32>
    %9 = vector.shape_cast %8 : vector<256x128xf32> to vector<4x8x8x128xf32>
    %c0_7 = arith.constant 0 : index
    %c0_8 = arith.constant 0 : index
    %c0_9 = arith.constant 0 : index
    %c0_10 = arith.constant 0 : index
    %10 = vector.load %arg11[%c0_7, %c0_8, %c0_9, %c0_10] : memref<4x8x8x128xf32, #tpu.memory_space<vmem>>, vector<4x8x8x128xf32>
    tpu.vector_store %arg11[%c0_7, %c0_8, %c0_9, %c0_10], %9 {strides = array<i32>} : memref<4x8x8x128xf32, #tpu.memory_space<vmem>>, vector<4x8x8x128xf32>,
    %cst_11 = arith.constant 0.000000e+00 : f32
    %11 = vector.broadcast %cst_11 : f32 to vector<64x128xf32>
    %c3 = arith.constant 3 : index
    %c0_12 = arith.constant 0 : index
    %c0_13 = arith.constant 0 : index
    %c0_14 = arith.constant 0 : index
    %12 = vector.load %arg11[%c3, %c0_12, %c0_13, %c0_14] : memref<4x8x8x128xf32, #tpu.memory_space<vmem>>, vector<1x8x8x128xf32>
    %13 = vector.shape_cast %12 : vector<1x8x8x128xf32> to vector<8x8x128xf32>
    %cst_15 = arith.constant 0.000000e+00 : f32
    %14 = vector.broadcast %cst_15 : f32 to vector<1x8x128xf32>
    %15 = vector.extract_strided_slice %13 {offsets = [0, 0, 0], sizes = [7, 8, 128], strides = [1, 1, 1]} : vector<8x8x128xf32> to vector<7x8x128xf32>
    %16 = tpu.concatenate %14, %15 in 0 : vector<1x8x128xf32>, vector<7x8x128xf32> -> vector<8x8x128xf32>
    %cst_16 = arith.constant 0.000000e+00 : f32
    %17 = vector.broadcast %cst_16 : f32 to vector<8x1x128xf32>
    %18 = vector.extract_strided_slice %16 {offsets = [0, 0, 0], sizes = [8, 7, 128], strides = [1, 1, 1]} : vector<8x8x128xf32> to vector<8x7x128xf32>
    %19 = tpu.concatenate %17, %18 in 1 : vector<8x1x128xf32>, vector<8x7x128xf32> -> vector<8x8x128xf32>
    %20 = vector.shape_cast %19 : vector<8x8x128xf32> to vector<64x128xf32>
    %21 = arith.truncf %20 : vector<64x128xf32> to vector<64x128xbf16>
    %c0_17 = arith.constant 0 : index
    %c0_18 = arith.constant 0 : index
    %c0_19 = arith.constant 0 : index
    %c0_20 = arith.constant 0 : index
    %22 = vector.load %arg4[%c0_17, %c0_18, %c0_19, %c0_20] : memref<3x3x128x128xbf16, #tpu.memory_space<vmem>>, vector<1x1x128x128xbf16>
    %23 = vector.shape_cast %22 : vector<1x1x128x128xbf16> to vector<128x128xbf16>
    %cst_21 = arith.constant dense<0.000000e+00> : vector<64x128xf32>
    %24 = tpu.matmul %21, %23, %cst_21 {dimension_numbers = #tpu.dot_dimension_numbers<[1], [0], [0], [1], [0, 0, 1, 1], [], []>} : vector<64x128xbf16>, vector<128x128xbf16>, vector<64x128xf32> -> vector<64x128xf32>
    %25 = arith.addf %11, %24 : vector<64x128xf32>
    %c2 = arith.constant 2 : index
    %c0_22 = arith.constant 0 : index
    %c0_23 = arith.constant 0 : index
    %c0_24 = arith.constant 0 : index
    %26 = vector.load %arg11[%c2, %c0_22, %c0_23, %c0_24] : memref<4x8x8x128xf32, #tpu.memory_space<vmem>>, vector<1x8x8x128xf32>
    %27 = vector.shape_cast %26 : vector<1x8x8x128xf32> to vector<8x8x128xf32>
    %cst_25 = arith.constant 0.000000e+00 : f32
    %28 = vector.broadcast %cst_25 : f32 to vector<1x8x128xf32>
    %29 = vector.extract_strided_slice %27 {offsets = [0, 0, 0], sizes = [7, 8, 128], strides = [1, 1, 1]} : vector<8x8x128xf32> to vector<7x8x128xf32>
    %30 = tpu.concatenate %28, %29 in 0 : vector<1x8x128xf32>, vector<7x8x128xf32> -> vector<8x8x128xf32>
    %31 = vector.shape_cast %30 : vector<8x8x128xf32> to vector<64x128xf32>
    %32 = arith.truncf %31 : vector<64x128xf32> to vector<64x128xbf16>
    %c0_26 = arith.constant 0 : index
    %c1 = arith.constant 1 : index
    %c0_27 = arith.constant 0 : index
    %c0_28 = arith.constant 0 : index
    %33 = vector.load %arg4[%c0_26, %c1, %c0_27, %c0_28] : memref<3x3x128x128xbf16, #tpu.memory_space<vmem>>, vector<1x1x128x128xbf16>
    %34 = vector.shape_cast %33 : vector<1x1x128x128xbf16> to vector<128x128xbf16>
    %cst_29 = arith.constant dense<0.000000e+00> : vector<64x128xf32>
    %35 = tpu.matmul %32, %34, %cst_29 {dimension_numbers = #tpu.dot_dimension_numbers<[1], [0], [0], [1], [0, 0, 1, 1], [], []>} : vector<64x128xbf16>, vector<128x128xbf16>, vector<64x128xf32> -> vector<64x128xf32>
    %36 = arith.addf %25, %35 : vector<64x128xf32>
    %c3_30 = arith.constant 3 : index
    %c0_31 = arith.constant 0 : index
    %c0_32 = arith.constant 0 : index
    %c0_33 = arith.constant 0 : index
    %37 = vector.load %arg11[%c3_30, %c0_31, %c0_32, %c0_33] : memref<4x8x8x128xf32, #tpu.memory_space<vmem>>, vector<1x8x8x128xf32>
    %38 = vector.shape_cast %37 : vector<1x8x8x128xf32> to vector<8x8x128xf32>
    %cst_34 = arith.constant 0.000000e+00 : f32
    %39 = vector.broadcast %cst_34 : f32 to vector<1x8x128xf32>
    %40 = vector.extract_strided_slice %38 {offsets = [0, 0, 0], sizes = [7, 8, 128], strides = [1, 1, 1]} : vector<8x8x128xf32> to vector<7x8x128xf32>
    %41 = tpu.concatenate %39, %40 in 0 : vector<1x8x128xf32>, vector<7x8x128xf32> -> vector<8x8x128xf32>
    %42 = vector.shape_cast %41 : vector<8x8x128xf32> to vector<64x128xf32>
    %43 = arith.truncf %42 : vector<64x128xf32> to vector<64x128xbf16>
    %c0_35 = arith.constant 0 : index
    %c2_36 = arith.constant 2 : index
    %c0_37 = arith.constant 0 : index
    %c0_38 = arith.constant 0 : index
    %44 = vector.load %arg4[%c0_35, %c2_36, %c0_37, %c0_38] : memref<3x3x128x128xbf16, #tpu.memory_space<vmem>>, vector<1x1x128x128xbf16>
    %45 = vector.shape_cast %44 : vector<1x1x128x128xbf16> to vector<128x128xbf16>
    %cst_39 = arith.constant dense<0.000000e+00> : vector<64x128xf32>
    %46 = tpu.matmul %43, %45, %cst_39 {dimension_numbers = #tpu.dot_dimension_numbers<[1], [0], [0], [1], [0, 0, 1, 1], [], []>} : vector<64x128xbf16>, vector<128x128xbf16>, vector<64x128xf32> -> vector<64x128xf32>
    %47 = arith.addf %36, %46 : vector<64x128xf32>
    %c1_40 = arith.constant 1 : index
    %c0_41 = arith.constant 0 : index
    %c0_42 = arith.constant 0 : index
    %c0_43 = arith.constant 0 : index
    %48 = vector.load %arg11[%c1_40, %c0_41, %c0_42, %c0_43] : memref<4x8x8x128xf32, #tpu.memory_space<vmem>>, vector<1x8x8x128xf32>
    %49 = vector.shape_cast %48 : vector<1x8x8x128xf32> to vector<8x8x128xf32>
    %cst_44 = arith.constant 0.000000e+00 : f32
    %50 = vector.broadcast %cst_44 : f32 to vector<8x1x128xf32>
    %51 = vector.extract_strided_slice %49 {offsets = [0, 0, 0], sizes = [8, 7, 128], strides = [1, 1, 1]} : vector<8x8x128xf32> to vector<8x7x128xf32>
    %52 = tpu.concatenate %50, %51 in 1 : vector<8x1x128xf32>, vector<8x7x128xf32> -> vector<8x8x128xf32>
    %53 = vector.shape_cast %52 : vector<8x8x128xf32> to vector<64x128xf32>
    %54 = arith.truncf %53 : vector<64x128xf32> to vector<64x128xbf16>
    %c1_45 = arith.constant 1 : index
    %c0_46 = arith.constant 0 : index
    %c0_47 = arith.constant 0 : index
    %c0_48 = arith.constant 0 : index
    %55 = vector.load %arg4[%c1_45, %c0_46, %c0_47, %c0_48] : memref<3x3x128x128xbf16, #tpu.memory_space<vmem>>, vector<1x1x128x128xbf16>
    %56 = vector.shape_cast %55 : vector<1x1x128x128xbf16> to vector<128x128xbf16>
    %cst_49 = arith.constant dense<0.000000e+00> : vector<64x128xf32>
    %57 = tpu.matmul %54, %56, %cst_49 {dimension_numbers = #tpu.dot_dimension_numbers<[1], [0], [0], [1], [0, 0, 1, 1], [], []>} : vector<64x128xbf16>, vector<128x128xbf16>, vector<64x128xf32> -> vector<64x128xf32>
    %58 = arith.addf %47, %57 : vector<64x128xf32>
    %c0_50 = arith.constant 0 : index
    %c0_51 = arith.constant 0 : index
    %c0_52 = arith.constant 0 : index
    %c0_53 = arith.constant 0 : index
    %59 = vector.load %arg11[%c0_50, %c0_51, %c0_52, %c0_53] : memref<4x8x8x128xf32, #tpu.memory_space<vmem>>, vector<1x8x8x128xf32>
    %60 = vector.shape_cast %59 : vector<1x8x8x128xf32> to vector<8x8x128xf32>
    %61 = vector.shape_cast %60 : vector<8x8x128xf32> to vector<64x128xf32>
    %62 = arith.truncf %61 : vector<64x128xf32> to vector<64x128xbf16>
    %c1_54 = arith.constant 1 : index
    %c1_55 = arith.constant 1 : index
    %c0_56 = arith.constant 0 : index
    %c0_57 = arith.constant 0 : index
    %63 = vector.load %arg4[%c1_54, %c1_55, %c0_56, %c0_57] : memref<3x3x128x128xbf16, #tpu.memory_space<vmem>>, vector<1x1x128x128xbf16>
    %64 = vector.shape_cast %63 : vector<1x1x128x128xbf16> to vector<128x128xbf16>
    %cst_58 = arith.constant dense<0.000000e+00> : vector<64x128xf32>
    %65 = tpu.matmul %62, %64, %cst_58 {dimension_numbers = #tpu.dot_dimension_numbers<[1], [0], [0], [1], [0, 0, 1, 1], [], []>} : vector<64x128xbf16>, vector<128x128xbf16>, vector<64x128xf32> -> vector<64x128xf32>
    %66 = arith.addf %58, %65 : vector<64x128xf32>
    %c1_59 = arith.constant 1 : index
    %c0_60 = arith.constant 0 : index
    %c0_61 = arith.constant 0 : index
    %c0_62 = arith.constant 0 : index
    %67 = vector.load %arg11[%c1_59, %c0_60, %c0_61, %c0_62] : memref<4x8x8x128xf32, #tpu.memory_space<vmem>>, vector<1x8x8x128xf32>
    %68 = vector.shape_cast %67 : vector<1x8x8x128xf32> to vector<8x8x128xf32>
    %69 = vector.shape_cast %68 : vector<8x8x128xf32> to vector<64x128xf32>
    %70 = arith.truncf %69 : vector<64x128xf32> to vector<64x128xbf16>
    %c1_63 = arith.constant 1 : index
    %c2_64 = arith.constant 2 : index
    %c0_65 = arith.constant 0 : index
    %c0_66 = arith.constant 0 : index
    %71 = vector.load %arg4[%c1_63, %c2_64, %c0_65, %c0_66] : memref<3x3x128x128xbf16, #tpu.memory_space<vmem>>, vector<1x1x128x128xbf16>
    %72 = vector.shape_cast %71 : vector<1x1x128x128xbf16> to vector<128x128xbf16>
    %cst_67 = arith.constant dense<0.000000e+00> : vector<64x128xf32>
    %73 = tpu.matmul %70, %72, %cst_67 {dimension_numbers = #tpu.dot_dimension_numbers<[1], [0], [0], [1], [0, 0, 1, 1], [], []>} : vector<64x128xbf16>, vector<128x128xbf16>, vector<64x128xf32> -> vector<64x128xf32>
    %74 = arith.addf %66, %73 : vector<64x128xf32>
    %c3_68 = arith.constant 3 : index
    %c0_69 = arith.constant 0 : index
    %c0_70 = arith.constant 0 : index
    %c0_71 = arith.constant 0 : index
    %75 = vector.load %arg11[%c3_68, %c0_69, %c0_70, %c0_71] : memref<4x8x8x128xf32, #tpu.memory_space<vmem>>, vector<1x8x8x128xf32>
    %76 = vector.shape_cast %75 : vector<1x8x8x128xf32> to vector<8x8x128xf32>
    %cst_72 = arith.constant 0.000000e+00 : f32
    %77 = vector.broadcast %cst_72 : f32 to vector<8x1x128xf32>
    %78 = vector.extract_strided_slice %76 {offsets = [0, 0, 0], sizes = [8, 7, 128], strides = [1, 1, 1]} : vector<8x8x128xf32> to vector<8x7x128xf32>
    %79 = tpu.concatenate %77, %78 in 1 : vector<8x1x128xf32>, vector<8x7x128xf32> -> vector<8x8x128xf32>
    %80 = vector.shape_cast %79 : vector<8x8x128xf32> to vector<64x128xf32>
    %81 = arith.truncf %80 : vector<64x128xf32> to vector<64x128xbf16>
    %c2_73 = arith.constant 2 : index
    %c0_74 = arith.constant 0 : index
    %c0_75 = arith.constant 0 : index
    %c0_76 = arith.constant 0 : index
    %82 = vector.load %arg4[%c2_73, %c0_74, %c0_75, %c0_76] : memref<3x3x128x128xbf16, #tpu.memory_space<vmem>>, vector<1x1x128x128xbf16>
    %83 = vector.shape_cast %82 : vector<1x1x128x128xbf16> to vector<128x128xbf16>
    %cst_77 = arith.constant dense<0.000000e+00> : vector<64x128xf32>
    %84 = tpu.matmul %81, %83, %cst_77 {dimension_numbers = #tpu.dot_dimension_numbers<[1], [0], [0], [1], [0, 0, 1, 1], [], []>} : vector<64x128xbf16>, vector<128x128xbf16>, vector<64x128xf32> -> vector<64x128xf32>
    %85 = arith.addf %74, %84 : vector<64x128xf32>
    %c2_78 = arith.constant 2 : index
    %c0_79 = arith.constant 0 : index
    %c0_80 = arith.constant 0 : index
    %c0_81 = arith.constant 0 : index
    %86 = vector.load %arg11[%c2_78, %c0_79, %c0_80, %c0_81] : memref<4x8x8x128xf32, #tpu.memory_space<vmem>>, vector<1x8x8x128xf32>
    %87 = vector.shape_cast %86 : vector<1x8x8x128xf32> to vector<8x8x128xf32>
    %88 = vector.shape_cast %87 : vector<8x8x128xf32> to vector<64x128xf32>
    %89 = arith.truncf %88 : vector<64x128xf32> to vector<64x128xbf16>
    %c2_82 = arith.constant 2 : index
    %c1_83 = arith.constant 1 : index
    %c0_84 = arith.constant 0 : index
    %c0_85 = arith.constant 0 : index
    %90 = vector.load %arg4[%c2_82, %c1_83, %c0_84, %c0_85] : memref<3x3x128x128xbf16, #tpu.memory_space<vmem>>, vector<1x1x128x128xbf16>
    %91 = vector.shape_cast %90 : vector<1x1x128x128xbf16> to vector<128x128xbf16>
    %cst_86 = arith.constant dense<0.000000e+00> : vector<64x128xf32>
    %92 = tpu.matmul %89, %91, %cst_86 {dimension_numbers = #tpu.dot_dimension_numbers<[1], [0], [0], [1], [0, 0, 1, 1], [], []>} : vector<64x128xbf16>, vector<128x128xbf16>, vector<64x128xf32> -> vector<64x128xf32>
    %93 = arith.addf %85, %92 : vector<64x128xf32>
    %c3_87 = arith.constant 3 : index
    %c0_88 = arith.constant 0 : index
    %c0_89 = arith.constant 0 : index
    %c0_90 = arith.constant 0 : index
    %94 = vector.load %arg11[%c3_87, %c0_88, %c0_89, %c0_90] : memref<4x8x8x128xf32, #tpu.memory_space<vmem>>, vector<1x8x8x128xf32>
    %95 = vector.shape_cast %94 : vector<1x8x8x128xf32> to vector<8x8x128xf32>
    %96 = vector.shape_cast %95 : vector<8x8x128xf32> to vector<64x128xf32>
    %97 = arith.truncf %96 : vector<64x128xf32> to vector<64x128xbf16>
    %c2_91 = arith.constant 2 : index
    %c2_92 = arith.constant 2 : index
    %c0_93 = arith.constant 0 : index
    %c0_94 = arith.constant 0 : index
    %98 = vector.load %arg4[%c2_91, %c2_92, %c0_93, %c0_94] : memref<3x3x128x128xbf16, #tpu.memory_space<vmem>>, vector<1x1x128x128xbf16>
    %99 = vector.shape_cast %98 : vector<1x1x128x128xbf16> to vector<128x128xbf16>
    %cst_95 = arith.constant dense<0.000000e+00> : vector<64x128xf32>
    %100 = tpu.matmul %97, %99, %cst_95 {dimension_numbers = #tpu.dot_dimension_numbers<[1], [0], [0], [1], [0, 0, 1, 1], [], []>} : vector<64x128xbf16>, vector<128x128xbf16>, vector<64x128xf32> -> vector<64x128xf32>
    %101 = arith.addf %93, %100 : vector<64x128xf32>
    %c0_96 = arith.constant 0 : index
    %c0_97 = arith.constant 0 : index
    %102 = vector.load %arg5[%c0_96, %c0_97] : memref<1x128xf32, #tpu.memory_space<vmem>>, vector<1x128xf32>
    %103 = vector.broadcast %102 : vector<1x128xf32> to vector<64x128xf32>
    %104 = arith.addf %101, %103 : vector<64x128xf32>
    %cst_98 = arith.constant 0.000000e+00 : f32
    %105 = vector.broadcast %cst_98 : f32 to vector<64x128xf32>
    %106 = arith.maximumf %104, %105 : vector<64x128xf32>
    %107 = arith.truncf %106 : vector<64x128xf32> to vector<64x128xbf16>
    %c0_99 = arith.constant 0 : index
    %c0_100 = arith.constant 0 : index
    %108 = vector.load %arg6[%c0_99, %c0_100] : memref<128x128xbf16, #tpu.memory_space<vmem>>, vector<128x128xbf16>
    %cst_101 = arith.constant dense<0.000000e+00> : vector<64x128xf32>
    %109 = tpu.matmul %107, %108, %cst_101 {dimension_numbers = #tpu.dot_dimension_numbers<[1], [0], [0], [1], [0, 0, 1, 1], [], []>} : vector<64x128xbf16>, vector<128x128xbf16>, vector<64x128xf32> -> vector<64x128xf32>
    %c0_102 = arith.constant 0 : index
    %c0_103 = arith.constant 0 : index
    %110 = vector.load %arg7[%c0_102, %c0_103] : memref<1x128xf32, #tpu.memory_space<vmem>>, vector<1x128xf32>
    %111 = vector.broadcast %110 : vector<1x128xf32> to vector<64x128xf32>
    %112 = arith.addf %109, %111 : vector<64x128xf32>
    %113 = vector.extract_strided_slice %1 {offsets = [0, 0], sizes = [64, 16], strides = [1, 1]} : vector<256x16xbf16> to vector<64x16xbf16>
    %c0_104 = arith.constant 0 : index
    %c0_105 = arith.constant 0 : index
    %114 = vector.load %arg8[%c0_104, %c0_105] : memref<16x128xbf16, #tpu.memory_space<vmem>>, vector<16x128xbf16>
    %cst_106 = arith.constant dense<0.000000e+00> : vector<64x128xf32>
    %115 = tpu.matmul %113, %114, %cst_106 {dimension_numbers = #tpu.dot_dimension_numbers<[1], [0], [0], [1], [0, 0, 1, 1], [], []>} : vector<64x16xbf16>, vector<16x128xbf16>, vector<64x128xf32> -> vector<64x128xf32>
    %c0_107 = arith.constant 0 : index
    %c0_108 = arith.constant 0 : index
    %116 = vector.load %arg9[%c0_107, %c0_108] : memref<1x128xf32, #tpu.memory_space<vmem>>, vector<1x128xf32>
    %117 = vector.broadcast %116 : vector<1x128xf32> to vector<64x128xf32>
    %118 = arith.addf %115, %117 : vector<64x128xf32>
    %119 = arith.addf %112, %118 : vector<64x128xf32>
    %cst_109 = arith.constant 0.000000e+00 : f32
    %120 = vector.broadcast %cst_109 : f32 to vector<64x128xf32>
    %121 = arith.maximumf %119, %120 : vector<64x128xf32>
    %122 = vector.shape_cast %121 : vector<64x128xf32> to vector<8x8x128xf32>
    %c0_110 = arith.constant 0 : index
    %c0_111 = arith.constant 0 : index
    %c0_112 = arith.constant 0 : index
    %c0_113 = arith.constant 0 : index
    %123 = vector.load %arg10[%c0_110, %c0_111, %c0_112, %c0_113] : memref<1x8x8x128xf32, #tpu.memory_space<vmem>>, vector<1x8x8x128xf32>
    %124 = vector.shape_cast %123 : vector<1x8x8x128xf32> to vector<8x8x128xf32>
    %125 = vector.shape_cast %122 : vector<8x8x128xf32> to vector<1x8x8x128xf32>
    tpu.vector_store %arg10[%c0_110, %c0_111, %c0_112, %c0_113], %125 {strides = array<i32>} : memref<1x8x8x128xf32, #tpu.memory_space<vmem>>, vector<1x8x8x128xf32>,
    return
  }
  func.func @transform_0(%arg0: i32) -> (i32, i32, i32) {
    %c0_i32 = arith.constant 0 : i32
    %c0_i32_0 = arith.constant 0 : i32
    %c0_i32_1 = arith.constant 0 : i32
    return %arg0, %c0_i32, %c0_i32_0 : i32, i32, i32
  }
  func.func @transform_1(%arg0: i32) -> (i32, i32) {
    %c0_i32 = arith.constant 0 : i32
    %c0_i32_0 = arith.constant 0 : i32
    %c0_i32_1 = arith.constant 0 : i32
    return %c0_i32, %c0_i32_0 : i32, i32
  }
  func.func @transform_2(%arg0: i32) -> (i32, i32) {
    %c0_i32 = arith.constant 0 : i32
    %c0_i32_0 = arith.constant 0 : i32
    %c0_i32_1 = arith.constant 0 : i32
    return %c0_i32, %c0_i32_0 : i32, i32
  }
  func.func @transform_3(%arg0: i32) -> (i32, i32, i32, i32) {
    %c0_i32 = arith.constant 0 : i32
    %c0_i32_0 = arith.constant 0 : i32
    %c0_i32_1 = arith.constant 0 : i32
    %c0_i32_2 = arith.constant 0 : i32
    %c0_i32_3 = arith.constant 0 : i32
    return %c0_i32, %c0_i32_0, %c0_i32_1, %c0_i32_2 : i32, i32, i32, i32
  }
  func.func @transform_4(%arg0: i32) -> (i32, i32) {
    %c0_i32 = arith.constant 0 : i32
    %c0_i32_0 = arith.constant 0 : i32
    %c0_i32_1 = arith.constant 0 : i32
    return %c0_i32, %c0_i32_0 : i32, i32
  }
  func.func @transform_5(%arg0: i32) -> (i32, i32) {
    %c0_i32 = arith.constant 0 : i32
    %c0_i32_0 = arith.constant 0 : i32
    %c0_i32_1 = arith.constant 0 : i32
    return %c0_i32, %c0_i32_0 : i32, i32
  }
  func.func @transform_6(%arg0: i32) -> (i32, i32) {
    %c0_i32 = arith.constant 0 : i32
    %c0_i32_0 = arith.constant 0 : i32
    %c0_i32_1 = arith.constant 0 : i32
    return %c0_i32, %c0_i32_0 : i32, i32
  }
  func.func @transform_7(%arg0: i32) -> (i32, i32) {
    %c0_i32 = arith.constant 0 : i32
    %c0_i32_0 = arith.constant 0 : i32
    %c0_i32_1 = arith.constant 0 : i32
    return %c0_i32, %c0_i32_0 : i32, i32
  }
  func.func @transform_8(%arg0: i32) -> (i32, i32) {
    %c0_i32 = arith.constant 0 : i32
    %c0_i32_0 = arith.constant 0 : i32
    %c0_i32_1 = arith.constant 0 : i32
    return %c0_i32, %c0_i32_0 : i32, i32
  }
  func.func @transform_9(%arg0: i32) -> (i32, i32, i32, i32) {
    %c0_i32 = arith.constant 0 : i32
    %c0_i32_0 = arith.constant 0 : i32
    %c0_i32_1 = arith.constant 0 : i32
    %c0_i32_2 = arith.constant 0 : i32
    return %arg0, %c0_i32, %c0_i32_0, %c0_i32_1 : i32, i32, i32, i32
  }
}

</mosaic_0001>

<llo_original>
// kernel: tpu_custom_call.1
$region0: #{tpu_custom_call.1}
  #allocation0 [shape = 'u32[]', space=smem, size = 0x4, offset = 0x4, fixed_abs, tag = 'smem constant byte address 0x4 - core index']
  #allocation1 [shape = 'u32[72,128]{1,0:T(1,128)}', space=vmem, size = 0x9000, scoped, tag = 'internal scratch']
  #allocation2 [shape = 'f32[4,8,8,128]{3,2,1,0:T(8,128)}', space=vmem, size = 0x20000, scoped, tag = 'scratch operand']
  %s0 = inlined_call_operand.vmem [shape: bf16[2,256,16], index: 0, kind: input, shape index: {}]
  %s1 = inlined_call_operand.vmem [shape: bf16[16,128], index: 1, kind: input, shape index: {}]
  %s2 = inlined_call_operand.vmem [shape: f32[1,128], index: 2, kind: input, shape index: {}]
  %s3 = inlined_call_operand.hbm [shape: bf16[3,3,128,128], index: 3, kind: input, shape index: {}]
  %s4 = inlined_call_operand.vmem [shape: f32[1,128], index: 4, kind: input, shape index: {}]
  %s5 = inlined_call_operand.vmem [shape: bf16[128,128], index: 5, kind: input, shape index: {}]
  %s6 = inlined_call_operand.vmem [shape: f32[1,128], index: 6, kind: input, shape index: {}]
  %s7 = inlined_call_operand.vmem [shape: bf16[16,128], index: 7, kind: input, shape index: {}]
  %s8 = inlined_call_operand.vmem [shape: f32[1,128], index: 8, kind: input, shape index: {}]
  %s9 = inlined_call_operand.hbm [shape: f32[2,8,8,128], index: 9, kind: output, shape index: {}]
  %s10 = sld [smem:[#allocation0]]
  $region73: #{tpu_custom_call.1} parent=0
    _
  %s12 = ssub.s32 1, %s10
  %s13 = scalar_select 0, %s12, %s10
  $region1: #{tpu_custom_call.1} parent=0
    #allocation3 [shape = 'u8[294912]{0}', space=vmem, size = 0x48000, scoped, tag = 'input window, operand 3, single buffered']
    #allocation4 [shape = 's32[2]{0}', space=sflag, size = 0x8, scoped, tag = 'scoped memory for tpu_custom_call.1']
    #allocation5 [shape = 's32[2]{0}', space=sflag, size = 0x8, scoped, tag = 'scoped memory for tpu_custom_call.1']
    #allocation6 [shape = 'u8[65536]{0}', space=vmem, size = 0x10000, scoped, tag = 'output window, operand 0']
    %14 = vsyncpa [#allocation4], 0
    %15 = vsyncpa [#allocation5], 0
    %s16 = scalar_lea.sflag [#allocation5], 1
    %17 = vsyncpa %s16, 0
    loop: start=0, step=1, limit=4
    $region2: #{tpu_custom_call.1} parent=1 // loop_pre_header
      _
    $region3: #{tpu_custom_call.1} parent=1 // loop_header
      %s19 = sphi 0, %s23
      %p20 = scmp.ge.s32.totalorder %s19, 4
      %s29 = sphi 0, %s31
      %s32 = sphi 0, %s29
      %s33 = sphi 0, %s32
      %s49 = sphi 0, %s33
      %s53 = sphi 0, %s53
      %s55 = sphi 0, %s53
      %s56 = sphi 0, %s55
      %s70 = sphi 0, %s56
      %s74 = sphi 0, %s74
      %s76 = sphi 0, %s74
      %s77 = sphi 0, %s76
      %s91 = sphi 0, %s77
      %s95 = sphi 0, %s95
      %s97 = sphi 0, %s95
      %s98 = sphi 0, %s97
      %s112 = sphi 0, %s98
      %s116 = sphi 0, %s116
      %s118 = sphi 0, %s116
      %s119 = sphi 0, %s118
      %s133 = sphi 0, %s119
      %s137 = sphi 0, %s137
      %s139 = sphi 0, %s137
      %s140 = sphi 0, %s139
      %s154 = sphi 0, %s140
      %s158 = sphi 0, %s158
      %s160 = sphi 0, %s158
      %s161 = sphi 0, %s160
      %s175 = sphi 0, %s161
      %s179 = sphi 0, %s179
      %s181 = sphi 0, %s179
      %s182 = sphi 0, %s181
      %s196 = sphi 0, %s182
      %s200 = sphi 0, %s200
      %s202 = sphi 0, %s200
      %s203 = sphi 0, %s202
      %s217 = sphi 0, %s203
      %s223 = sphi 0, %s225
      %s226 = sphi 0, %s223
      %s227 = sphi 0, %s226
      %s243 = sphi 0, %s227
    $region4: #{tpu_custom_call.1} parent=1 // loop_header_branch
      %22 = sbr.rel (%p20) target = $region8
    $region5: #{tpu_custom_call.1} parent=1 // loop_body
      %s24 = ssub.s32 %s19, 1
      %s25 = ssub.s32 %s19, 2
      %s26 = sadd.s32 %s19, 1
      %s27 = ssub.s32 %s19, %s26
      %p28 = scmp.eq.s32.totalorder %s27, 0
      %s30 = sadd.s32 %s29, 1
      %s31 = scalar_select %p28, %s29, %s30
      %p34 = pneg %p28
      %p35 = scmp.eq.s32.totalorder %s19, 1
      %p36 = por %p34, %p35
      %p37 = scmp.ne.s32.totalorder %s29, %s32
      %p38 = scmp.eq.s32.totalorder %s19, 0
      %p39 = por %p37, %p38
      %p40 = scmp.ne.s32.totalorder %s29, %s32
      %p41 = scmp.eq.s32.totalorder %s24, 1
      %p42 = por %p40, %p41
      %p43 = scmp.ne.s32.totalorder %s32, %s33
      %p44 = scmp.eq.s32.totalorder %s24, 0
      %p45 = por %p43, %p44
      %p46 = scmp.ne.s32.totalorder %s32, %s33
      %p47 = scmp.eq.s32.totalorder %s25, 1
      %p48 = por %p46, %p47
      %p50 = scmp.ne.s32.totalorder %s33, %s49
      %p51 = scmp.eq.s32.totalorder %s25, 0
      %p52 = por %p50, %p51
      %s54 = sadd.s32 %s53, 1
      %p57 = scmp.eq.s32.totalorder %s19, 1
      %p58 = scmp.ne.s32.totalorder %s53, %s55
      %p59 = scmp.eq.s32.totalorder %s19, 0
      %p60 = por %p58, %p59
      %p61 = scmp.ne.s32.totalorder %s53, %s55
      %p62 = scmp.eq.s32.totalorder %s24, 1
      %p63 = por %p61, %p62
      %p64 = scmp.ne.s32.totalorder %s55, %s56
      %p65 = scmp.eq.s32.totalorder %s24, 0
      %p66 = por %p64, %p65
      %p67 = scmp.ne.s32.totalorder %s55, %s56
      %p68 = scmp.eq.s32.totalorder %s25, 1
      %p69 = por %p67, %p68
      %p71 = scmp.ne.s32.totalorder %s56, %s70
      %p72 = scmp.eq.s32.totalorder %s25, 0
      %p73 = por %p71, %p72
      %s75 = sadd.s32 %s74, 1
      %p78 = scmp.eq.s32.totalorder %s19, 1
      %p79 = scmp.ne.s32.totalorder %s74, %s76
      %p80 = scmp.eq.s32.totalorder %s19, 0
      %p81 = por %p79, %p80
      %p82 = scmp.ne.s32.totalorder %s74, %s76
      %p83 = scmp.eq.s32.totalorder %s24, 1
      %p84 = por %p82, %p83
      %p85 = scmp.ne.s32.totalorder %s76, %s77
      %p86 = scmp.eq.s32.totalorder %s24, 0
      %p87 = por %p85, %p86
      %p88 = scmp.ne.s32.totalorder %s76, %s77
      %p89 = scmp.eq.s32.totalorder %s25, 1
      %p90 = por %p88, %p89
      %p92 = scmp.ne.s32.totalorder %s77, %s91
      %p93 = scmp.eq.s32.totalorder %s25, 0
      %p94 = por %p92, %p93
      %s96 = sadd.s32 %s95, 1
      %p99 = scmp.eq.s32.totalorder %s19, 1
      %p100 = scmp.ne.s32.totalorder %s95, %s97
      %p101 = scmp.eq.s32.totalorder %s19, 0
      %p102 = por %p100, %p101
      %p103 = scmp.ne.s32.totalorder %s95, %s97
      %p104 = scmp.eq.s32.totalorder %s24, 1
      %p105 = por %p103, %p104
      %p106 = scmp.ne.s32.totalorder %s97, %s98
      %p107 = scmp.eq.s32.totalorder %s24, 0
      %p108 = por %p106, %p107
      %p109 = scmp.ne.s32.totalorder %s97, %s98
      %p110 = scmp.eq.s32.totalorder %s25, 1
      %p111 = por %p109, %p110
      %p113 = scmp.ne.s32.totalorder %s98, %s112
      %p114 = scmp.eq.s32.totalorder %s25, 0
      %p115 = por %p113, %p114
      %s117 = sadd.s32 %s116, 1
      %p120 = scmp.eq.s32.totalorder %s19, 1
      %p121 = scmp.ne.s32.totalorder %s116, %s118
      %p122 = scmp.eq.s32.totalorder %s19, 0
      %p123 = por %p121, %p122
      %p124 = scmp.ne.s32.totalorder %s116, %s118
      %p125 = scmp.eq.s32.totalorder %s24, 1
      %p126 = por %p124, %p125
      %p127 = scmp.ne.s32.totalorder %s118, %s119
      %p128 = scmp.eq.s32.totalorder %s24, 0
      %p129 = por %p127, %p128
      %p130 = scmp.ne.s32.totalorder %s118, %s119
      %p131 = scmp.eq.s32.totalorder %s25, 1
      %p132 = por %p130, %p131
      %p134 = scmp.ne.s32.totalorder %s119, %s133
      %p135 = scmp.eq.s32.totalorder %s25, 0
      %p136 = por %p134, %p135
      %s138 = sadd.s32 %s137, 1
      %p141 = scmp.eq.s32.totalorder %s19, 1
      %p142 = scmp.ne.s32.totalorder %s137, %s139
      %p143 = scmp.eq.s32.totalorder %s19, 0
      %p144 = por %p142, %p143
      %p145 = scmp.ne.s32.totalorder %s137, %s139
      %p146 = scmp.eq.s32.totalorder %s24, 1
      %p147 = por %p145, %p146
      %p148 = scmp.ne.s32.totalorder %s139, %s140
      %p149 = scmp.eq.s32.totalorder %s24, 0
      %p150 = por %p148, %p149
      %p151 = scmp.ne.s32.totalorder %s139, %s140
      %p152 = scmp.eq.s32.totalorder %s25, 1
      %p153 = por %p151, %p152
      %p155 = scmp.ne.s32.totalorder %s140, %s154
      %p156 = scmp.eq.s32.totalorder %s25, 0
      %p157 = por %p155, %p156
      %s159 = sadd.s32 %s158, 1
      %p162 = scmp.eq.s32.totalorder %s19, 1
      %p163 = scmp.ne.s32.totalorder %s158, %s160
      %p164 = scmp.eq.s32.totalorder %s19, 0
      %p165 = por %p163, %p164
      %p166 = scmp.ne.s32.totalorder %s158, %s160
      %p167 = scmp.eq.s32.totalorder %s24, 1
      %p168 = por %p166, %p167
      %p169 = scmp.ne.s32.totalorder %s160, %s161
      %p170 = scmp.eq.s32.totalorder %s24, 0
      %p171 = por %p169, %p170
      %p172 = scmp.ne.s32.totalorder %s160, %s161
      %p173 = scmp.eq.s32.totalorder %s25, 1
      %p174 = por %p172, %p173
      %p176 = scmp.ne.s32.totalorder %s161, %s175
      %p177 = scmp.eq.s32.totalorder %s25, 0
      %p178 = por %p176, %p177
      %s180 = sadd.s32 %s179, 1
      %p183 = scmp.eq.s32.totalorder %s19, 1
      %p184 = scmp.ne.s32.totalorder %s179, %s181
      %p185 = scmp.eq.s32.totalorder %s19, 0
      %p186 = por %p184, %p185
      %p187 = scmp.ne.s32.totalorder %s179, %s181
      %p188 = scmp.eq.s32.totalorder %s24, 1
      %p189 = por %p187, %p188
      %p190 = scmp.ne.s32.totalorder %s181, %s182
      %p191 = scmp.eq.s32.totalorder %s24, 0
      %p192 = por %p190, %p191
      %p193 = scmp.ne.s32.totalorder %s181, %s182
      %p194 = scmp.eq.s32.totalorder %s25, 1
      %p195 = por %p193, %p194
      %p197 = scmp.ne.s32.totalorder %s182, %s196
      %p198 = scmp.eq.s32.totalorder %s25, 0
      %p199 = por %p197, %p198
      %s201 = sadd.s32 %s200, 1
      %p204 = scmp.eq.s32.totalorder %s19, 1
      %p205 = scmp.ne.s32.totalorder %s200, %s202
      %p206 = scmp.eq.s32.totalorder %s19, 0
      %p207 = por %p205, %p206
      %p208 = scmp.ne.s32.totalorder %s200, %s202
      %p209 = scmp.eq.s32.totalorder %s24, 1
      %p210 = por %p208, %p209
      %p211 = scmp.ne.s32.totalorder %s202, %s203
      %p212 = scmp.eq.s32.totalorder %s24, 0
      %p213 = por %p211, %p212
      %p214 = scmp.ne.s32.totalorder %s202, %s203
      %p215 = scmp.eq.s32.totalorder %s25, 1
      %p216 = por %p214, %p215
      %p218 = scmp.ne.s32.totalorder %s203, %s217
      %p219 = scmp.eq.s32.totalorder %s25, 0
      %p220 = por %p218, %p219
      %s221 = ssub.s32 %s19, %s26
      %p222 = scmp.eq.s32.totalorder %s221, 0
      %s224 = sadd.s32 %s223, 1
      %s225 = scalar_select %p222, %s223, %s224
      %p228 = pneg %p222
      %p229 = scmp.eq.s32.totalorder %s19, 1
      %p230 = por %p228, %p229
      %p231 = scmp.ne.s32.totalorder %s223, %s226
      %p232 = scmp.eq.s32.totalorder %s19, 0
      %p233 = por %p231, %p232
      %p234 = scmp.ne.s32.totalorder %s223, %s226
      %p235 = scmp.eq.s32.totalorder %s24, 1
      %p236 = por %p234, %p235
      %p237 = scmp.ne.s32.totalorder %s226, %s227
      %p238 = scmp.eq.s32.totalorder %s24, 0
      %p239 = por %p237, %p238
      %p240 = scmp.ne.s32.totalorder %s226, %s227
      %p241 = scmp.eq.s32.totalorder %s25, 1
      %p242 = por %p240, %p241
      %p244 = scmp.ne.s32.totalorder %s227, %s243
      %p245 = scmp.eq.s32.totalorder %s25, 0
      %p246 = por %p244, %p245
      %p247 = scmp.le.s32.totalorder 1, %s19
      %p248 = scmp.lt.s32.totalorder %s19, 3
      %p249 = pnand %p247, %p248
      %p250 = pneg %p249
      // Predicated region
      $region9: #{tpu_custom_call.1} parent=5 // pred_check
        _
      $region10: #{tpu_custom_call.1} parent=5 // pred_check_branch
        %252 = sbr.rel (%p249) target = $region12
      $region11: #{tpu_custom_call.1} parent=5 // pred_region
        %s253 = ssub.s32 %s19, 1
        // Predicated region
        $region13: #{tpu_custom_call.1} parent=11 // pred_check
          %p254 = pneg %p66
        $region14: #{tpu_custom_call.1} parent=11 // pred_check_branch
          %256 = sbr.rel (%p254) target = $region16
        $region15: #{tpu_custom_call.1} parent=11 // pred_region
          _
        $region16: #{tpu_custom_call.1} parent=11 // pred_fallthru
          _
        // Predicated region
        $region17: #{tpu_custom_call.1} parent=11 // pred_check
          %p257 = pneg %p87
        $region18: #{tpu_custom_call.1} parent=11 // pred_check_branch
          %259 = sbr.rel (%p257) target = $region20
        $region19: #{tpu_custom_call.1} parent=11 // pred_region
          _
        $region20: #{tpu_custom_call.1} parent=11 // pred_fallthru
          _
        // Predicated region
        $region21: #{tpu_custom_call.1} parent=11 // pred_check
          %p260 = pneg %p108
        $region22: #{tpu_custom_call.1} parent=11 // pred_check_branch
          %262 = sbr.rel (%p260) target = $region24
        $region23: #{tpu_custom_call.1} parent=11 // pred_region
          %264 = vsyncadd [#allocation4], 0
          %s265 = sshll.u32 %s3, 4
          %s266 = int_to_ptr.hbm [resolvable:$true] %s265
          %s267 = sshll.u32 [#allocation3], 4
          %s268 = int_to_ptr.vmem [resolvable:$true] %s267
          %273 = dma.hbm_to_vmem [thread:$0]  %s266, 9216, %s268, [#allocation4], 64, 64, 4
        $region24: #{tpu_custom_call.1} parent=11 // pred_fallthru
          _
        // Predicated region
        $region25: #{tpu_custom_call.1} parent=11 // pred_check
          %p274 = pneg %p129
        $region26: #{tpu_custom_call.1} parent=11 // pred_check_branch
          %276 = sbr.rel (%p274) target = $region28
        $region27: #{tpu_custom_call.1} parent=11 // pred_region
          _
        $region28: #{tpu_custom_call.1} parent=11 // pred_fallthru
          _
        // Predicated region
        $region29: #{tpu_custom_call.1} parent=11 // pred_check
          %p277 = pneg %p150
        $region30: #{tpu_custom_call.1} parent=11 // pred_check_branch
          %279 = sbr.rel (%p277) target = $region32
        $region31: #{tpu_custom_call.1} parent=11 // pred_region
          _
        $region32: #{tpu_custom_call.1} parent=11 // pred_fallthru
          _
        // Predicated region
        $region33: #{tpu_custom_call.1} parent=11 // pred_check
          %p280 = pneg %p171
        $region34: #{tpu_custom_call.1} parent=11 // pred_check_branch
          %282 = sbr.rel (%p280) target = $region36
        $region35: #{tpu_custom_call.1} parent=11 // pred_region
          _
        $region36: #{tpu_custom_call.1} parent=11 // pred_fallthru
          _
        // Predicated region
        $region37: #{tpu_custom_call.1} parent=11 // pred_check
          %p283 = pneg %p192
        $region38: #{tpu_custom_call.1} parent=11 // pred_check_branch
          %285 = sbr.rel (%p283) target = $region40
        $region39: #{tpu_custom_call.1} parent=11 // pred_region
          _
        $region40: #{tpu_custom_call.1} parent=11 // pred_fallthru
          _
        // Predicated region
        $region41: #{tpu_custom_call.1} parent=11 // pred_check
          %p286 = pneg %p213
        $region42: #{tpu_custom_call.1} parent=11 // pred_check_branch
          %288 = sbr.rel (%p286) target = $region44
        $region43: #{tpu_custom_call.1} parent=11 // pred_region
          _
        $region44: #{tpu_custom_call.1} parent=11 // pred_fallthru
          _
      $region12: #{tpu_custom_call.1} parent=5 // pred_fallthru
        _
      %p289 = scmp.lt.s32.totalorder %s19, 2
      // Predicated region
      $region45: #{tpu_custom_call.1} parent=5 // pred_check
        %p290 = pneg %p289
      $region46: #{tpu_custom_call.1} parent=5 // pred_check_branch
        %292 = sbr.rel (%p290) target = $region48
      $region47: #{tpu_custom_call.1} parent=5 // pred_region
        // Predicated region
        $region49: #{tpu_custom_call.1} parent=47 // pred_check
          %p293 = pneg %p39
        $region50: #{tpu_custom_call.1} parent=47 // pred_check_branch
          %295 = sbr.rel (%p293) target = $region52
        $region51: #{tpu_custom_call.1} parent=47 // pred_region
          %p296 = scmp.lt.s32.totalorder %s19, 1
          %s297 = scalar_select %p296, %s19, 1
          %s298 = smul.addr %s297, 32
          %s299 = smul.addr %s298, 4
          %s300 = scalar_lea.vmem %s0, %s299
        $region52: #{tpu_custom_call.1} parent=47 // pred_fallthru
          _
      $region48: #{tpu_custom_call.1} parent=5 // pred_fallthru
        _
      %p301 = scmp.le.s32.totalorder 1, %s19
      %p302 = scmp.lt.s32.totalorder %s19, 3
      %p303 = pnand %p301, %p302
      %p304 = pneg %p303
      // Predicated region
      $region53: #{tpu_custom_call.1} parent=5 // pred_check
        _
      $region54: #{tpu_custom_call.1} parent=5 // pred_check_branch
        %306 = sbr.rel (%p303) target = $region56
      $region55: #{tpu_custom_call.1} parent=5 // pred_region
        %s307 = ssub.s32 %s19, 1
        // Predicated region
        $region57: #{tpu_custom_call.1} parent=55 // pred_check
          %p308 = pneg %p108
        $region58: #{tpu_custom_call.1} parent=55 // pred_check_branch
          %310 = sbr.rel (%p308) target = $region60
        $region59: #{tpu_custom_call.1} parent=55 // pred_region
          %312 = dma.done [#allocation4], 9216
        $region60: #{tpu_custom_call.1} parent=55 // pred_fallthru
          _
        %p313 = scmp.lt.s32.totalorder %s24, 1
        %s314 = scalar_select %p313, %s24, 1
        %s315 = smul.addr %s314, 32
        %s316 = smul.addr %s315, 4
        %s317 = scalar_lea.vmem %s0, %s316
        %p318 = pneg %p45
        %p319 = pneg %p42
        %p320 = pneg %p66
        %p321 = pneg %p63
        %p322 = pneg %p87
        %p323 = pneg %p84
        %p324 = pneg %p108
        %p325 = pneg %p105
        %p326 = pneg %p129
        %p327 = pneg %p126
        %p328 = pneg %p150
        %p329 = pneg %p147
        %p330 = pneg %p171
        %p331 = pneg %p168
        %p332 = pneg %p192
        %p333 = pneg %p189
        %p334 = pneg %p213
        %p335 = pneg %p210
        %p336 = pneg %p239
        %p337 = pneg %p236
        %s338 = sand.u32 %s226, 1
        %s339 = scalar_lea.sflag [#allocation5], %s338
        %s340 = sand.u32 %s226, 1
        %s341 = smul.addr %s340, 64
        %s342 = scalar_lea.vmem [#allocation6], %s341
        %p343 = scmp.lt.s32.totalorder %s24, 1
        %s344 = scalar_select %p343, %s24, 1
        %s345 = smul.addr %s344, 32
        %s346 = smul.addr %s345, 4
        %s347 = scalar_lea.vmem %s0, %s346
        %v349 = vld [vmem:[%s347] sm:$0xf]
        %v350 = vld [vmem:[%s347 + $0x4] sm:$0xf]
        %v351 = vld [vmem:[%s347 + $0x8] sm:$0xf]
        %v352 = vld [vmem:[%s347 + $0xc] sm:$0xf]
        %v353 = vld [vmem:[%s347 + $0x10] sm:$0xf]
        %v354 = vld [vmem:[%s347 + $0x14] sm:$0xf]
        %v355 = vld [vmem:[%s347 + $0x18] sm:$0xf]
        %v356 = vld [vmem:[%s347 + $0x1c] sm:$0xf]
        %v357 = vld [vmem:[%s347 + $0x20] sm:$0xf]
        %v358 = vld [vmem:[%s347 + $0x24] sm:$0xf]
        %v359 = vld [vmem:[%s347 + $0x28] sm:$0xf]
        %v360 = vld [vmem:[%s347 + $0x2c] sm:$0xf]
        %v361 = vld [vmem:[%s347 + $0x30] sm:$0xf]
        %v362 = vld [vmem:[%s347 + $0x34] sm:$0xf]
        %v363 = vld [vmem:[%s347 + $0x38] sm:$0xf]
        %v364 = vld [vmem:[%s347 + $0x3c] sm:$0xf]
        %v365 = vld [vmem:[%s347 + $0x40] sm:$0xf]
        %v366 = vld [vmem:[%s347 + $0x44] sm:$0xf]
        %v367 = vld [vmem:[%s347 + $0x48] sm:$0xf]
        %v368 = vld [vmem:[%s347 + $0x4c] sm:$0xf]
        %v369 = vld [vmem:[%s347 + $0x50] sm:$0xf]
        %v370 = vld [vmem:[%s347 + $0x54] sm:$0xf]
        %v371 = vld [vmem:[%s347 + $0x58] sm:$0xf]
        %v372 = vld [vmem:[%s347 + $0x5c] sm:$0xf]
        %v373 = vld [vmem:[%s347 + $0x60] sm:$0xf]
        %v374 = vld [vmem:[%s347 + $0x64] sm:$0xf]
        %v375 = vld [vmem:[%s347 + $0x68] sm:$0xf]
        %v376 = vld [vmem:[%s347 + $0x6c] sm:$0xf]
        %v377 = vld [vmem:[%s347 + $0x70] sm:$0xf]
        %v378 = vld [vmem:[%s347 + $0x74] sm:$0xf]
        %v379 = vld [vmem:[%s347 + $0x78] sm:$0xf]
        %v380 = vld [vmem:[%s347 + $0x7c] sm:$0xf]
        %v381 = vld [vmem:[%s1] sm:$0xf]
        %v382 = vld [vmem:[%s1 + $0x4] sm:$0xf]
        %v383 = vld [vmem:[%s2] sm:$0x1]
        %v385 = vperm.slane %v383, 0
        %v419 = vunpack.c.l.b16 %v349
        %v420 = vunpack.c.l.b16 %v350
        %v421 = vunpack.c.l.b16 %v351
        %v422 = vunpack.c.l.b16 %v352
        %v423 = vunpack.c.l.b16 %v353
        %v424 = vunpack.c.l.b16 %v354
        %v425 = vunpack.c.l.b16 %v355
        %v426 = vunpack.c.l.b16 %v356
        %v427 = vunpack.c.l.b16 %v357
        %v428 = vunpack.c.l.b16 %v358
        %v429 = vunpack.c.l.b16 %v359
        %v430 = vunpack.c.l.b16 %v360
        %v431 = vunpack.c.l.b16 %v361
        %v432 = vunpack.c.l.b16 %v362
        %v433 = vunpack.c.l.b16 %v363
        %v434 = vunpack.c.l.b16 %v364
        %v435 = vunpack.c.l.b16 %v365
        %v436 = vunpack.c.l.b16 %v366
        %v437 = vunpack.c.l.b16 %v367
        %v438 = vunpack.c.l.b16 %v368
        %v439 = vunpack.c.l.b16 %v369
        %v440 = vunpack.c.l.b16 %v370
        %v441 = vunpack.c.l.b16 %v371
        %v442 = vunpack.c.l.b16 %v372
        %v443 = vunpack.c.l.b16 %v373
        %v444 = vunpack.c.l.b16 %v374
        %v445 = vunpack.c.l.b16 %v375
        %v446 = vunpack.c.l.b16 %v376
        %v447 = vunpack.c.l.b16 %v377
        %v448 = vunpack.c.l.b16 %v378
        %v449 = vunpack.c.l.b16 %v379
        %v450 = vunpack.c.l.b16 %v380
        %v451 = vpack.c.b16 %v420, %v419
        %v452 = vpack.c.b16 %v422, %v421
        %v453 = vpack.c.b16 %v424, %v423
        %v454 = vpack.c.b16 %v426, %v425
        %v455 = vpack.c.b16 %v428, %v427
        %v456 = vpack.c.b16 %v430, %v429
        %v457 = vpack.c.b16 %v432, %v431
        %v458 = vpack.c.b16 %v434, %v433
        %v459 = vpack.c.b16 %v436, %v435
        %v460 = vpack.c.b16 %v438, %v437
        %v461 = vpack.c.b16 %v440, %v439
        %v462 = vpack.c.b16 %v442, %v441
        %v463 = vpack.c.b16 %v444, %v443
        %v464 = vpack.c.b16 %v446, %v445
        %v465 = vpack.c.b16 %v448, %v447
        %v466 = vpack.c.b16 %v450, %v449
        %v469 = vunpack.c.l.b16 %v381
        %v470 = vunpack.c.l.b16 %v382
        %v471 = vpack.c.b16 %v470, %v469
        %vm473 = vcmask 130048
        %v475 = vsel %vm473, %v451, 0
        %v478 = vsel %vm473, %v452, 0
        %v481 = vsel %vm473, %v453, 0
        %v484 = vsel %vm473, %v454, 0
        %v487 = vsel %vm473, %v455, 0
        %v490 = vsel %vm473, %v456, 0
        %v493 = vsel %vm473, %v457, 0
        %v496 = vsel %vm473, %v458, 0
        %v499 = vsel %vm473, %v459, 0
        %v502 = vsel %vm473, %v460, 0
        %v505 = vsel %vm473, %v461, 0
        %v508 = vsel %vm473, %v462, 0
        %v511 = vsel %vm473, %v463, 0
        %v514 = vsel %vm473, %v464, 0
        %v517 = vsel %vm473, %v465, 0
        %v520 = vsel %vm473, %v466, 0
        %522 = vmatpush.bf16.msra.mxu0 0
        %523 = vmatpush.bf16.msra.mxu0 0
        %524 = vmatpush.bf16.msra.mxu0 0
        %525 = vmatpush.bf16.msra.mxu0 0
        %526 = vmatpush.bf16.msra.mxu0 0
        %527 = vmatpush.bf16.msra.mxu0 0
        %528 = vmatpush.bf16.msra.mxu0 0
        %529 = vmatpush.bf16.msra.mxu0 %v471
        %530 = vmatmul.bf16.gmra.mxu0 %v475
        %v531 = vpop.f32.mrf.mxu0
        %v532 = vadd.f32 %v385, %v531
        %v533 = vpop.f32.mrf.mxu0
        %v534 = vadd.f32 %v385, %v533
        %535 = vmatmul.bf16.gmra.mxu0 %v478
        %v536 = vpop.f32.mrf.mxu0
        %v537 = vadd.f32 %v385, %v536
        %v538 = vpop.f32.mrf.mxu0
        %v539 = vadd.f32 %v385, %v538
        %540 = vmatmul.bf16.gmra.mxu0 %v481
        %v541 = vpop.f32.mrf.mxu0
        %v542 = vadd.f32 %v385, %v541
        %v543 = vpop.f32.mrf.mxu0
        %v544 = vadd.f32 %v385, %v543
        %545 = vmatmul.bf16.gmra.mxu0 %v484
        %v546 = vpop.f32.mrf.mxu0
        %v547 = vadd.f32 %v385, %v546
        %v548 = vpop.f32.mrf.mxu0
        %v549 = vadd.f32 %v385, %v548
        %550 = vmatmul.bf16.gmra.mxu0 %v487
        %v551 = vpop.f32.mrf.mxu0
        %v552 = vadd.f32 %v385, %v551
        %v553 = vpop.f32.mrf.mxu0
        %v554 = vadd.f32 %v385, %v553
        %555 = vmatmul.bf16.gmra.mxu0 %v490
        %v556 = vpop.f32.mrf.mxu0
        %v557 = vadd.f32 %v385, %v556
        %v558 = vpop.f32.mrf.mxu0
        %v559 = vadd.f32 %v385, %v558
        %560 = vmatmul.bf16.gmra.mxu0 %v493
        %v561 = vpop.f32.mrf.mxu0
        %v562 = vadd.f32 %v385, %v561
        %v563 = vpop.f32.mrf.mxu0
        %v564 = vadd.f32 %v385, %v563
        %565 = vmatmul.bf16.gmra.mxu0 %v496
        %v566 = vpop.f32.mrf.mxu0
        %v567 = vadd.f32 %v385, %v566
        %v568 = vpop.f32.mrf.mxu0
        %v569 = vadd.f32 %v385, %v568
        %570 = vmatmul.bf16.gmra.mxu0 %v499
        %v571 = vpop.f32.mrf.mxu0
        %v572 = vadd.f32 %v385, %v571
        %v573 = vpop.f32.mrf.mxu0
        %v574 = vadd.f32 %v385, %v573
        %575 = vmatmul.bf16.gmra.mxu0 %v502
        %v576 = vpop.f32.mrf.mxu0
        %v577 = vadd.f32 %v385, %v576
        %v578 = vpop.f32.mrf.mxu0
        %v579 = vadd.f32 %v385, %v578
        %580 = vmatmul.bf16.gmra.mxu0 %v505
        %v581 = vpop.f32.mrf.mxu0
        %v582 = vadd.f32 %v385, %v581
        %v583 = vpop.f32.mrf.mxu0
        %v584 = vadd.f32 %v385, %v583
        %585 = vmatmul.bf16.gmra.mxu0 %v508
        %v586 = vpop.f32.mrf.mxu0
        %v587 = vadd.f32 %v385, %v586
        %v588 = vpop.f32.mrf.mxu0
        %v589 = vadd.f32 %v385, %v588
        %590 = vmatmul.bf16.gmra.mxu0 %v511
        %v591 = vpop.f32.mrf.mxu0
        %v592 = vadd.f32 %v385, %v591
        %v593 = vpop.f32.mrf.mxu0
        %v594 = vadd.f32 %v385, %v593
        %595 = vmatmul.bf16.gmra.mxu0 %v514
        %v596 = vpop.f32.mrf.mxu0
        %v597 = vadd.f32 %v385, %v596
        %v598 = vpop.f32.mrf.mxu0
        %v599 = vadd.f32 %v385, %v598
        %600 = vmatmul.bf16.gmra.mxu0 %v517
        %v601 = vpop.f32.mrf.mxu0
        %v602 = vadd.f32 %v385, %v601
        %v603 = vpop.f32.mrf.mxu0
        %v604 = vadd.f32 %v385, %v603
        %605 = vmatmul.bf16.gmra.mxu0 %v520
        %v606 = vpop.f32.mrf.mxu0
        %v607 = vadd.f32 %v385, %v606
        %v608 = vpop.f32.mrf.mxu0
        %v609 = vadd.f32 %v385, %v608
        %610 = vdwg.mxu0
        %v611 = vmax.f32 %v532, 0.0
        %v612 = vmax.f32 %v534, 0.0
        %v613 = vmax.f32 %v537, 0.0
        %v614 = vmax.f32 %v539, 0.0
        %v615 = vmax.f32 %v542, 0.0
        %v616 = vmax.f32 %v544, 0.0
        %v617 = vmax.f32 %v547, 0.0
        %v618 = vmax.f32 %v549, 0.0
        %v619 = vmax.f32 %v552, 0.0
        %v620 = vmax.f32 %v554, 0.0
        %v621 = vmax.f32 %v557, 0.0
        %v622 = vmax.f32 %v559, 0.0
        %v623 = vmax.f32 %v562, 0.0
        %v624 = vmax.f32 %v564, 0.0
        %v625 = vmax.f32 %v567, 0.0
        %v626 = vmax.f32 %v569, 0.0
        %v627 = vmax.f32 %v572, 0.0
        %v628 = vmax.f32 %v574, 0.0
        %v629 = vmax.f32 %v577, 0.0
        %v630 = vmax.f32 %v579, 0.0
        %v631 = vmax.f32 %v582, 0.0
        %v632 = vmax.f32 %v584, 0.0
        %v633 = vmax.f32 %v587, 0.0
        %v634 = vmax.f32 %v589, 0.0
        %v635 = vmax.f32 %v592, 0.0
        %v636 = vmax.f32 %v594, 0.0
        %v637 = vmax.f32 %v597, 0.0
        %v638 = vmax.f32 %v599, 0.0
        %v639 = vmax.f32 %v602, 0.0
        %v640 = vmax.f32 %v604, 0.0
        %v641 = vmax.f32 %v607, 0.0
        %v642 = vmax.f32 %v609, 0.0
        %643 = vst [vmem:[#allocation2] sm:$0xff] %v611
        %644 = vst [vmem:[#allocation2 + $0x8] sm:$0xff] %v612
        %645 = vst [vmem:[#allocation2 + $0x10] sm:$0xff] %v613
        %646 = vst [vmem:[#allocation2 + $0x18] sm:$0xff] %v614
        %647 = vst [vmem:[#allocation2 + $0x20] sm:$0xff] %v615
        %648 = vst [vmem:[#allocation2 + $0x28] sm:$0xff] %v616
        %649 = vst [vmem:[#allocation2 + $0x30] sm:$0xff] %v617
        %650 = vst [vmem:[#allocation2 + $0x38] sm:$0xff] %v618
        %651 = vst [vmem:[#allocation2 + $0x40] sm:$0xff] %v619
        %652 = vst [vmem:[#allocation2 + $0x48] sm:$0xff] %v620
        %653 = vst [vmem:[#allocation2 + $0x50] sm:$0xff] %v621
        %654 = vst [vmem:[#allocation2 + $0x58] sm:$0xff] %v622
        %655 = vst [vmem:[#allocation2 + $0x60] sm:$0xff] %v623
        %656 = vst [vmem:[#allocation2 + $0x68] sm:$0xff] %v624
        %657 = vst [vmem:[#allocation2 + $0x70] sm:$0xff] %v625
        %658 = vst [vmem:[#allocation2 + $0x78] sm:$0xff] %v626
        %659 = vst [vmem:[#allocation2 + $0x80] sm:$0xff] %v627
        %660 = vst [vmem:[#allocation2 + $0x88] sm:$0xff] %v628
        %661 = vst [vmem:[#allocation2 + $0x90] sm:$0xff] %v629
        %662 = vst [vmem:[#allocation2 + $0x98] sm:$0xff] %v630
        %663 = vst [vmem:[#allocation2 + $0xa0] sm:$0xff] %v631
        %664 = vst [vmem:[#allocation2 + $0xa8] sm:$0xff] %v632
        %665 = vst [vmem:[#allocation2 + $0xb0] sm:$0xff] %v633
        %666 = vst [vmem:[#allocation2 + $0xb8] sm:$0xff] %v634
        %667 = vst [vmem:[#allocation2 + $0xc0] sm:$0xff] %v635
        %668 = vst [vmem:[#allocation2 + $0xc8] sm:$0xff] %v636
        %669 = vst [vmem:[#allocation2 + $0xd0] sm:$0xff] %v637
        %670 = vst [vmem:[#allocation2 + $0xd8] sm:$0xff] %v638
        %671 = vst [vmem:[#allocation2 + $0xe0] sm:$0xff] %v639
        %672 = vst [vmem:[#allocation2 + $0xe8] sm:$0xff] %v640
        %673 = vst [vmem:[#allocation2 + $0xf0] sm:$0xff] %v641
        %674 = vst [vmem:[#allocation2 + $0xf8] sm:$0xff] %v642
        %s675 = scalar_lea.vmem [#allocation2], 192
        %v676 = vld [vmem:[%s675] sm:$0xff]
        %v677 = vld [vmem:[%s675 + $0x8] sm:$0xff]
        %v678 = vld [vmem:[%s675 + $0x10] sm:$0xff]
        %v679 = vld [vmem:[%s675 + $0x18] sm:$0xff]
        %v680 = vld [vmem:[%s675 + $0x20] sm:$0xff]
        %v681 = vld [vmem:[%s675 + $0x28] sm:$0xff]
        %v682 = vld [vmem:[%s675 + $0x30] sm:$0xff]
        %v683 = vld [vmem:[%s675 + $0x38] sm:$0xff]
        %v692 = vrot.slane 0.0, 7
        %v693 = vrot.slane %v676, 7
        %v694 = vrot.slane %v677, 7
        %v695 = vrot.slane %v678, 7
        %v696 = vrot.slane %v679, 7
        %v697 = vrot.slane %v680, 7
        %v698 = vrot.slane %v681, 7
        %v699 = vrot.slane %v682, 7
        %vm708 = vcmask 1040384
        %v709 = vsel %vm708, 0.0, %v692
        %v710 = vsel %vm708, 0.0, %v693
        %v711 = vsel %vm708, 0.0, %v694
        %v712 = vsel %vm708, 0.0, %v695
        %v713 = vsel %vm708, 0.0, %v696
        %v714 = vsel %vm708, 0.0, %v697
        %v715 = vsel %vm708, 0.0, %v698
        %v716 = vsel %vm708, 0.0, %v699
        %v717 = vpack.c.bf16 %v710, %v709
        %v718 = vpack.c.bf16 %v712, %v711
        %v719 = vpack.c.bf16 %v714, %v713
        %v720 = vpack.c.bf16 %v716, %v715
        %v721 = vld [vmem:[#allocation3] sm:$0xf]
        %v722 = vld [vmem:[#allocation3 + $0x4] sm:$0xf]
        %v723 = vld [vmem:[#allocation3 + $0x8] sm:$0xf]
        %v724 = vld [vmem:[#allocation3 + $0xc] sm:$0xf]
        %v725 = vld [vmem:[#allocation3 + $0x10] sm:$0xf]
        %v726 = vld [vmem:[#allocation3 + $0x14] sm:$0xf]
        %v727 = vld [vmem:[#allocation3 + $0x18] sm:$0xf]
        %v728 = vld [vmem:[#allocation3 + $0x1c] sm:$0xf]
        %v729 = vld [vmem:[#allocation3 + $0x20] sm:$0xf]
        %v730 = vld [vmem:[#allocation3 + $0x24] sm:$0xf]
        %v731 = vld [vmem:[#allocation3 + $0x28] sm:$0xf]
        %v732 = vld [vmem:[#allocation3 + $0x2c] sm:$0xf]
        %v733 = vld [vmem:[#allocation3 + $0x30] sm:$0xf]
        %v734 = vld [vmem:[#allocation3 + $0x34] sm:$0xf]
        %v735 = vld [vmem:[#allocation3 + $0x38] sm:$0xf]
        %v736 = vld [vmem:[#allocation3 + $0x3c] sm:$0xf]
        %s737 = scalar_lea.vmem [#allocation2], 128
        %v738 = vld [vmem:[%s737] sm:$0xff]
        %v739 = vld [vmem:[%s737 + $0x8] sm:$0xff]
        %v740 = vld [vmem:[%s737 + $0x10] sm:$0xff]
        %v741 = vld [vmem:[%s737 + $0x18] sm:$0xff]
        %v742 = vld [vmem:[%s737 + $0x20] sm:$0xff]
        %v743 = vld [vmem:[%s737 + $0x28] sm:$0xff]
        %v744 = vld [vmem:[%s737 + $0x30] sm:$0xff]
        %v745 = vld [vmem:[%s737 + $0x38] sm:$0xff]
        %v746 = vpack.c.bf16 %v738, 0.0
        %v747 = vpack.c.bf16 %v740, %v739
        %v748 = vpack.c.bf16 %v742, %v741
        %v749 = vpack.c.bf16 %v744, %v743
        %s750 = scalar_lea.vmem [#allocation3], 64
        %v751 = vld [vmem:[%s750] sm:$0xf]
        %v752 = vld [vmem:[%s750 + $0x4] sm:$0xf]
        %v753 = vld [vmem:[%s750 + $0x8] sm:$0xf]
        %v754 = vld [vmem:[%s750 + $0xc] sm:$0xf]
        %v755 = vld [vmem:[%s750 + $0x10] sm:$0xf]
        %v756 = vld [vmem:[%s750 + $0x14] sm:$0xf]
        %v757 = vld [vmem:[%s750 + $0x18] sm:$0xf]
        %v758 = vld [vmem:[%s750 + $0x1c] sm:$0xf]
        %v759 = vld [vmem:[%s750 + $0x20] sm:$0xf]
        %v760 = vld [vmem:[%s750 + $0x24] sm:$0xf]
        %v761 = vld [vmem:[%s750 + $0x28] sm:$0xf]
        %v762 = vld [vmem:[%s750 + $0x2c] sm:$0xf]
        %v763 = vld [vmem:[%s750 + $0x30] sm:$0xf]
        %v764 = vld [vmem:[%s750 + $0x34] sm:$0xf]
        %v765 = vld [vmem:[%s750 + $0x38] sm:$0xf]
        %v766 = vld [vmem:[%s750 + $0x3c] sm:$0xf]
        %v783 = vunpack.c.l.b16 %v751
        %v784 = vunpack.c.l.b16 %v752
        %v785 = vunpack.c.l.b16 %v753
        %v786 = vunpack.c.l.b16 %v754
        %v787 = vunpack.c.l.b16 %v755
        %v788 = vunpack.c.l.b16 %v756
        %v789 = vunpack.c.l.b16 %v757
        %v790 = vunpack.c.l.b16 %v758
        %v791 = vunpack.c.l.b16 %v759
        %v792 = vunpack.c.l.b16 %v760
        %v793 = vunpack.c.l.b16 %v761
        %v794 = vunpack.c.l.b16 %v762
        %v795 = vunpack.c.l.b16 %v763
        %v796 = vunpack.c.l.b16 %v764
        %v797 = vunpack.c.l.b16 %v765
        %v798 = vunpack.c.l.b16 %v766
        %v799 = vpack.c.b16 %v784, %v783
        %v800 = vpack.c.b16 %v786, %v785
        %v801 = vpack.c.b16 %v788, %v787
        %v802 = vpack.c.b16 %v790, %v789
        %v803 = vpack.c.b16 %v792, %v791
        %v804 = vpack.c.b16 %v794, %v793
        %v805 = vpack.c.b16 %v796, %v795
        %v806 = vpack.c.b16 %v798, %v797
        %815 = vmatpush.bf16.msra.mxu0 %v806
        %816 = vmatpush.bf16.msra.mxu0 %v805
        %817 = vmatpush.bf16.msra.mxu0 %v804
        %818 = vmatpush.bf16.msra.mxu0 %v803
        %819 = vmatpush.bf16.msra.mxu0 %v802
        %820 = vmatpush.bf16.msra.mxu0 %v801
        %821 = vmatpush.bf16.msra.mxu0 %v800
        %822 = vmatpush.bf16.msra.mxu0 %v799
        %823 = vmatmul.bf16.gmra.mxu0 %v746
        %v824 = vpop.f32.mrf.mxu0
        %v825 = vadd.f32 0.0, %v824
        %v826 = vpop.f32.mrf.mxu0
        %v827 = vadd.f32 0.0, %v826
        %828 = vmatmul.bf16.gmra.mxu0 %v747
        %v829 = vpop.f32.mrf.mxu0
        %v830 = vadd.f32 0.0, %v829
        %v831 = vpop.f32.mrf.mxu0
        %v832 = vadd.f32 0.0, %v831
        %833 = vmatmul.bf16.gmra.mxu0 %v748
        %v834 = vpop.f32.mrf.mxu0
        %v835 = vadd.f32 0.0, %v834
        %v836 = vpop.f32.mrf.mxu0
        %v837 = vadd.f32 0.0, %v836
        %838 = vmatmul.bf16.gmra.mxu0 %v749
        %v839 = vpop.f32.mrf.mxu0
        %v840 = vadd.f32 0.0, %v839
        %v841 = vpop.f32.mrf.mxu0
        %v842 = vadd.f32 0.0, %v841
        %843 = vdwg.mxu0
        %v860 = vunpack.c.l.b16 %v721
        %v861 = vunpack.c.l.b16 %v722
        %v862 = vunpack.c.l.b16 %v723
        %v863 = vunpack.c.l.b16 %v724
        %v864 = vunpack.c.l.b16 %v725
        %v865 = vunpack.c.l.b16 %v726
        %v866 = vunpack.c.l.b16 %v727
        %v867 = vunpack.c.l.b16 %v728
        %v868 = vunpack.c.l.b16 %v729
        %v869 = vunpack.c.l.b16 %v730
        %v870 = vunpack.c.l.b16 %v731
        %v871 = vunpack.c.l.b16 %v732
        %v872 = vunpack.c.l.b16 %v733
        %v873 = vunpack.c.l.b16 %v734
        %v874 = vunpack.c.l.b16 %v735
        %v875 = vunpack.c.l.b16 %v736
        %v876 = vpack.c.b16 %v861, %v860
        %v877 = vpack.c.b16 %v863, %v862
        %v878 = vpack.c.b16 %v865, %v864
        %v879 = vpack.c.b16 %v867, %v866
        %v880 = vpack.c.b16 %v869, %v868
        %v881 = vpack.c.b16 %v871, %v870
        %v882 = vpack.c.b16 %v873, %v872
        %v883 = vpack.c.b16 %v875, %v874
        %892 = vmatpush.bf16.msra.mxu0 %v883
        %893 = vmatpush.bf16.msra.mxu0 %v882
        %894 = vmatpush.bf16.msra.mxu0 %v881
        %895 = vmatpush.bf16.msra.mxu0 %v880
        %896 = vmatpush.bf16.msra.mxu0 %v879
        %897 = vmatpush.bf16.msra.mxu0 %v878
        %898 = vmatpush.bf16.msra.mxu0 %v877
        %899 = vmatpush.bf16.msra.mxu0 %v876
        %900 = vmatmul.bf16.gmra.mxu0 %v717
        %v901 = vpop.f32.mrf.mxu0
        %v902 = vadd.f32 %v825, %v901
        %v903 = vpop.f32.mrf.mxu0
        %v904 = vadd.f32 %v827, %v903
        %905 = vmatmul.bf16.gmra.mxu0 %v718
        %v906 = vpop.f32.mrf.mxu0
        %v907 = vadd.f32 %v830, %v906
        %v908 = vpop.f32.mrf.mxu0
        %v909 = vadd.f32 %v832, %v908
        %910 = vmatmul.bf16.gmra.mxu0 %v719
        %v911 = vpop.f32.mrf.mxu0
        %v912 = vadd.f32 %v835, %v911
        %v913 = vpop.f32.mrf.mxu0
        %v914 = vadd.f32 %v837, %v913
        %915 = vmatmul.bf16.gmra.mxu0 %v720
        %v916 = vpop.f32.mrf.mxu0
        %v917 = vadd.f32 %v840, %v916
        %v918 = vpop.f32.mrf.mxu0
        %v919 = vadd.f32 %v842, %v918
        %920 = vdwg.mxu0
        %v921 = vpack.c.bf16 %v676, 0.0
        %v922 = vpack.c.bf16 %v678, %v677
        %v923 = vpack.c.bf16 %v680, %v679
        %v924 = vpack.c.bf16 %v682, %v681
        %s925 = scalar_lea.vmem [#allocation3], 128
        %v926 = vld [vmem:[%s925] sm:$0xf]
        %v927 = vld [vmem:[%s925 + $0x4] sm:$0xf]
        %v928 = vld [vmem:[%s925 + $0x8] sm:$0xf]
        %v929 = vld [vmem:[%s925 + $0xc] sm:$0xf]
        %v930 = vld [vmem:[%s925 + $0x10] sm:$0xf]
        %v931 = vld [vmem:[%s925 + $0x14] sm:$0xf]
        %v932 = vld [vmem:[%s925 + $0x18] sm:$0xf]
        %v933 = vld [vmem:[%s925 + $0x1c] sm:$0xf]
        %v934 = vld [vmem:[%s925 + $0x20] sm:$0xf]
        %v935 = vld [vmem:[%s925 + $0x24] sm:$0xf]
        %v936 = vld [vmem:[%s925 + $0x28] sm:$0xf]
        %v937 = vld [vmem:[%s925 + $0x2c] sm:$0xf]
        %v938 = vld [vmem:[%s925 + $0x30] sm:$0xf]
        %v939 = vld [vmem:[%s925 + $0x34] sm:$0xf]
        %v940 = vld [vmem:[%s925 + $0x38] sm:$0xf]
        %v941 = vld [vmem:[%s925 + $0x3c] sm:$0xf]
        %v958 = vunpack.c.l.b16 %v926
        %v959 = vunpack.c.l.b16 %v927
        %v960 = vunpack.c.l.b16 %v928
        %v961 = vunpack.c.l.b16 %v929
        %v962 = vunpack.c.l.b16 %v930
        %v963 = vunpack.c.l.b16 %v931
        %v964 = vunpack.c.l.b16 %v932
        %v965 = vunpack.c.l.b16 %v933
        %v966 = vunpack.c.l.b16 %v934
        %v967 = vunpack.c.l.b16 %v935
        %v968 = vunpack.c.l.b16 %v936
        %v969 = vunpack.c.l.b16 %v937
        %v970 = vunpack.c.l.b16 %v938
        %v971 = vunpack.c.l.b16 %v939
        %v972 = vunpack.c.l.b16 %v940
        %v973 = vunpack.c.l.b16 %v941
        %v974 = vpack.c.b16 %v959, %v958
        %v975 = vpack.c.b16 %v961, %v960
        %v976 = vpack.c.b16 %v963, %v962
        %v977 = vpack.c.b16 %v965, %v964
        %v978 = vpack.c.b16 %v967, %v966
        %v979 = vpack.c.b16 %v969, %v968
        %v980 = vpack.c.b16 %v971, %v970
        %v981 = vpack.c.b16 %v973, %v972
        %990 = vmatpush.bf16.msra.mxu0 %v981
        %991 = vmatpush.bf16.msra.mxu0 %v980
        %992 = vmatpush.bf16.msra.mxu0 %v979
        %993 = vmatpush.bf16.msra.mxu0 %v978
        %994 = vmatpush.bf16.msra.mxu0 %v977
        %995 = vmatpush.bf16.msra.mxu0 %v976
        %996 = vmatpush.bf16.msra.mxu0 %v975
        %997 = vmatpush.bf16.msra.mxu0 %v974
        %998 = vmatmul.bf16.gmra.mxu0 %v921
        %v999 = vpop.f32.mrf.mxu0
        %v1000 = vadd.f32 0.0, %v999
        %v1001 = vpop.f32.mrf.mxu0
        %v1002 = vadd.f32 0.0, %v1001
        %1003 = vmatmul.bf16.gmra.mxu0 %v922
        %v1004 = vpop.f32.mrf.mxu0
        %v1005 = vadd.f32 0.0, %v1004
        %v1006 = vpop.f32.mrf.mxu0
        %v1007 = vadd.f32 0.0, %v1006
        %1008 = vmatmul.bf16.gmra.mxu0 %v923
        %v1009 = vpop.f32.mrf.mxu0
        %v1010 = vadd.f32 0.0, %v1009
        %v1011 = vpop.f32.mrf.mxu0
        %v1012 = vadd.f32 0.0, %v1011
        %1013 = vmatmul.bf16.gmra.mxu0 %v924
        %v1014 = vpop.f32.mrf.mxu0
        %v1015 = vadd.f32 0.0, %v1014
        %v1016 = vpop.f32.mrf.mxu0
        %v1017 = vadd.f32 0.0, %v1016
        %1018 = vdwg.mxu0
        %v1019 = vadd.f32 %v902, %v1000
        %v1020 = vadd.f32 %v904, %v1002
        %v1021 = vadd.f32 %v907, %v1005
        %v1022 = vadd.f32 %v909, %v1007
        %v1023 = vadd.f32 %v912, %v1010
        %v1024 = vadd.f32 %v914, %v1012
        %v1025 = vadd.f32 %v917, %v1015
        %v1026 = vadd.f32 %v919, %v1017
        %s1027 = scalar_lea.vmem [#allocation2], 64
        %v1028 = vld [vmem:[%s1027] sm:$0xff]
        %v1029 = vld [vmem:[%s1027 + $0x8] sm:$0xff]
        %v1030 = vld [vmem:[%s1027 + $0x10] sm:$0xff]
        %v1031 = vld [vmem:[%s1027 + $0x18] sm:$0xff]
        %v1032 = vld [vmem:[%s1027 + $0x20] sm:$0xff]
        %v1033 = vld [vmem:[%s1027 + $0x28] sm:$0xff]
        %v1034 = vld [vmem:[%s1027 + $0x30] sm:$0xff]
        %v1035 = vld [vmem:[%s1027 + $0x38] sm:$0xff]
        %v1044 = vrot.slane %v1028, 7
        %v1045 = vrot.slane %v1029, 7
        %v1046 = vrot.slane %v1030, 7
        %v1047 = vrot.slane %v1031, 7
        %v1048 = vrot.slane %v1032, 7
        %v1049 = vrot.slane %v1033, 7
        %v1050 = vrot.slane %v1034, 7
        %v1051 = vrot.slane %v1035, 7
        %v1060 = vsel %vm708, 0.0, %v1044
        %v1061 = vsel %vm708, 0.0, %v1045
        %v1062 = vsel %vm708, 0.0, %v1046
        %v1063 = vsel %vm708, 0.0, %v1047
        %v1064 = vsel %vm708, 0.0, %v1048
        %v1065 = vsel %vm708, 0.0, %v1049
        %v1066 = vsel %vm708, 0.0, %v1050
        %v1067 = vsel %vm708, 0.0, %v1051
        %v1068 = vpack.c.bf16 %v1061, %v1060
        %v1069 = vpack.c.bf16 %v1063, %v1062
        %v1070 = vpack.c.bf16 %v1065, %v1064
        %v1071 = vpack.c.bf16 %v1067, %v1066
        %s1072 = scalar_lea.vmem [#allocation3], 192
        %v1073 = vld [vmem:[%s1072] sm:$0xf]
        %v1074 = vld [vmem:[%s1072 + $0x4] sm:$0xf]
        %v1075 = vld [vmem:[%s1072 + $0x8] sm:$0xf]
        %v1076 = vld [vmem:[%s1072 + $0xc] sm:$0xf]
        %v1077 = vld [vmem:[%s1072 + $0x10] sm:$0xf]
        %v1078 = vld [vmem:[%s1072 + $0x14] sm:$0xf]
        %v1079 = vld [vmem:[%s1072 + $0x18] sm:$0xf]
        %v1080 = vld [vmem:[%s1072 + $0x1c] sm:$0xf]
        %v1081 = vld [vmem:[%s1072 + $0x20] sm:$0xf]
        %v1082 = vld [vmem:[%s1072 + $0x24] sm:$0xf]
        %v1083 = vld [vmem:[%s1072 + $0x28] sm:$0xf]
        %v1084 = vld [vmem:[%s1072 + $0x2c] sm:$0xf]
        %v1085 = vld [vmem:[%s1072 + $0x30] sm:$0xf]
        %v1086 = vld [vmem:[%s1072 + $0x34] sm:$0xf]
        %v1087 = vld [vmem:[%s1072 + $0x38] sm:$0xf]
        %v1088 = vld [vmem:[%s1072 + $0x3c] sm:$0xf]
        %v1105 = vunpack.c.l.b16 %v1073
        %v1106 = vunpack.c.l.b16 %v1074
        %v1107 = vunpack.c.l.b16 %v1075
        %v1108 = vunpack.c.l.b16 %v1076
        %v1109 = vunpack.c.l.b16 %v1077
        %v1110 = vunpack.c.l.b16 %v1078
        %v1111 = vunpack.c.l.b16 %v1079
        %v1112 = vunpack.c.l.b16 %v1080
        %v1113 = vunpack.c.l.b16 %v1081
        %v1114 = vunpack.c.l.b16 %v1082
        %v1115 = vunpack.c.l.b16 %v1083
        %v1116 = vunpack.c.l.b16 %v1084
        %v1117 = vunpack.c.l.b16 %v1085
        %v1118 = vunpack.c.l.b16 %v1086
        %v1119 = vunpack.c.l.b16 %v1087
        %v1120 = vunpack.c.l.b16 %v1088
        %v1121 = vpack.c.b16 %v1106, %v1105
        %v1122 = vpack.c.b16 %v1108, %v1107
        %v1123 = vpack.c.b16 %v1110, %v1109
        %v1124 = vpack.c.b16 %v1112, %v1111
        %v1125 = vpack.c.b16 %v1114, %v1113
        %v1126 = vpack.c.b16 %v1116, %v1115
        %v1127 = vpack.c.b16 %v1118, %v1117
        %v1128 = vpack.c.b16 %v1120, %v1119
        %1137 = vmatpush.bf16.msra.mxu0 %v1128
        %1138 = vmatpush.bf16.msra.mxu0 %v1127
        %1139 = vmatpush.bf16.msra.mxu0 %v1126
        %1140 = vmatpush.bf16.msra.mxu0 %v1125
        %1141 = vmatpush.bf16.msra.mxu0 %v1124
        %1142 = vmatpush.bf16.msra.mxu0 %v1123
        %1143 = vmatpush.bf16.msra.mxu0 %v1122
        %1144 = vmatpush.bf16.msra.mxu0 %v1121
        %1145 = vmatmul.bf16.gmra.mxu0 %v1068
        %v1146 = vpop.f32.mrf.mxu0
        %v1147 = vadd.f32 0.0, %v1146
        %v1148 = vpop.f32.mrf.mxu0
        %v1149 = vadd.f32 0.0, %v1148
        %1150 = vmatmul.bf16.gmra.mxu0 %v1069
        %v1151 = vpop.f32.mrf.mxu0
        %v1152 = vadd.f32 0.0, %v1151
        %v1153 = vpop.f32.mrf.mxu0
        %v1154 = vadd.f32 0.0, %v1153
        %1155 = vmatmul.bf16.gmra.mxu0 %v1070
        %v1156 = vpop.f32.mrf.mxu0
        %v1157 = vadd.f32 0.0, %v1156
        %v1158 = vpop.f32.mrf.mxu0
        %v1159 = vadd.f32 0.0, %v1158
        %1160 = vmatmul.bf16.gmra.mxu0 %v1071
        %v1161 = vpop.f32.mrf.mxu0
        %v1162 = vadd.f32 0.0, %v1161
        %v1163 = vpop.f32.mrf.mxu0
        %v1164 = vadd.f32 0.0, %v1163
        %1165 = vdwg.mxu0
        %v1166 = vadd.f32 %v1019, %v1147
        %v1167 = vadd.f32 %v1020, %v1149
        %v1168 = vadd.f32 %v1021, %v1152
        %v1169 = vadd.f32 %v1022, %v1154
        %v1170 = vadd.f32 %v1023, %v1157
        %v1171 = vadd.f32 %v1024, %v1159
        %v1172 = vadd.f32 %v1025, %v1162
        %v1173 = vadd.f32 %v1026, %v1164
        %v1174 = vld [vmem:[#allocation2] sm:$0xff]
        %v1175 = vld [vmem:[#allocation2 + $0x8] sm:$0xff]
        %v1176 = vld [vmem:[#allocation2 + $0x10] sm:$0xff]
        %v1177 = vld [vmem:[#allocation2 + $0x18] sm:$0xff]
        %v1178 = vld [vmem:[#allocation2 + $0x20] sm:$0xff]
        %v1179 = vld [vmem:[#allocation2 + $0x28] sm:$0xff]
        %v1180 = vld [vmem:[#allocation2 + $0x30] sm:$0xff]
        %v1181 = vld [vmem:[#allocation2 + $0x38] sm:$0xff]
        %v1182 = vpack.c.bf16 %v1175, %v1174
        %v1183 = vpack.c.bf16 %v1177, %v1176
        %v1184 = vpack.c.bf16 %v1179, %v1178
        %v1185 = vpack.c.bf16 %v1181, %v1180
        %s1186 = scalar_lea.vmem [#allocation3], 256
        %v1187 = vld [vmem:[%s1186] sm:$0xf]
        %v1188 = vld [vmem:[%s1186 + $0x4] sm:$0xf]
        %v1189 = vld [vmem:[%s1186 + $0x8] sm:$0xf]
        %v1190 = vld [vmem:[%s1186 + $0xc] sm:$0xf]
        %v1191 = vld [vmem:[%s1186 + $0x10] sm:$0xf]
        %v1192 = vld [vmem:[%s1186 + $0x14] sm:$0xf]
        %v1193 = vld [vmem:[%s1186 + $0x18] sm:$0xf]
        %v1194 = vld [vmem:[%s1186 + $0x1c] sm:$0xf]
        %v1195 = vld [vmem:[%s1186 + $0x20] sm:$0xf]
        %v1196 = vld [vmem:[%s1186 + $0x24] sm:$0xf]
        %v1197 = vld [vmem:[%s1186 + $0x28] sm:$0xf]
        %v1198 = vld [vmem:[%s1186 + $0x2c] sm:$0xf]
        %v1199 = vld [vmem:[%s1186 + $0x30] sm:$0xf]
        %v1200 = vld [vmem:[%s1186 + $0x34] sm:$0xf]
        %v1201 = vld [vmem:[%s1186 + $0x38] sm:$0xf]
        %v1202 = vld [vmem:[%s1186 + $0x3c] sm:$0xf]
        %v1219 = vunpack.c.l.b16 %v1187
        %v1220 = vunpack.c.l.b16 %v1188
        %v1221 = vunpack.c.l.b16 %v1189
        %v1222 = vunpack.c.l.b16 %v1190
        %v1223 = vunpack.c.l.b16 %v1191
        %v1224 = vunpack.c.l.b16 %v1192
        %v1225 = vunpack.c.l.b16 %v1193
        %v1226 = vunpack.c.l.b16 %v1194
        %v1227 = vunpack.c.l.b16 %v1195
        %v1228 = vunpack.c.l.b16 %v1196
        %v1229 = vunpack.c.l.b16 %v1197
        %v1230 = vunpack.c.l.b16 %v1198
        %v1231 = vunpack.c.l.b16 %v1199
        %v1232 = vunpack.c.l.b16 %v1200
        %v1233 = vunpack.c.l.b16 %v1201
        %v1234 = vunpack.c.l.b16 %v1202
        %v1235 = vpack.c.b16 %v1220, %v1219
        %v1236 = vpack.c.b16 %v1222, %v1221
        %v1237 = vpack.c.b16 %v1224, %v1223
        %v1238 = vpack.c.b16 %v1226, %v1225
        %v1239 = vpack.c.b16 %v1228, %v1227
        %v1240 = vpack.c.b16 %v1230, %v1229
        %v1241 = vpack.c.b16 %v1232, %v1231
        %v1242 = vpack.c.b16 %v1234, %v1233
        %1251 = vmatpush.bf16.msra.mxu0 %v1242
        %1252 = vmatpush.bf16.msra.mxu0 %v1241
        %1253 = vmatpush.bf16.msra.mxu0 %v1240
        %1254 = vmatpush.bf16.msra.mxu0 %v1239
        %1255 = vmatpush.bf16.msra.mxu0 %v1238
        %1256 = vmatpush.bf16.msra.mxu0 %v1237
        %1257 = vmatpush.bf16.msra.mxu0 %v1236
        %1258 = vmatpush.bf16.msra.mxu0 %v1235
        %1259 = vmatmul.bf16.gmra.mxu0 %v1182
        %v1260 = vpop.f32.mrf.mxu0
        %v1261 = vadd.f32 0.0, %v1260
        %v1262 = vpop.f32.mrf.mxu0
        %v1263 = vadd.f32 0.0, %v1262
        %1264 = vmatmul.bf16.gmra.mxu0 %v1183
        %v1265 = vpop.f32.mrf.mxu0
        %v1266 = vadd.f32 0.0, %v1265
        %v1267 = vpop.f32.mrf.mxu0
        %v1268 = vadd.f32 0.0, %v1267
        %1269 = vmatmul.bf16.gmra.mxu0 %v1184
        %v1270 = vpop.f32.mrf.mxu0
        %v1271 = vadd.f32 0.0, %v1270
        %v1272 = vpop.f32.mrf.mxu0
        %v1273 = vadd.f32 0.0, %v1272
        %1274 = vmatmul.bf16.gmra.mxu0 %v1185
        %v1275 = vpop.f32.mrf.mxu0
        %v1276 = vadd.f32 0.0, %v1275
        %v1277 = vpop.f32.mrf.mxu0
        %v1278 = vadd.f32 0.0, %v1277
        %1279 = vdwg.mxu0
        %v1280 = vadd.f32 %v1166, %v1261
        %v1281 = vadd.f32 %v1167, %v1263
        %v1282 = vadd.f32 %v1168, %v1266
        %v1283 = vadd.f32 %v1169, %v1268
        %v1284 = vadd.f32 %v1170, %v1271
        %v1285 = vadd.f32 %v1171, %v1273
        %v1286 = vadd.f32 %v1172, %v1276
        %v1287 = vadd.f32 %v1173, %v1278
        %v1288 = vpack.c.bf16 %v1029, %v1028
        %v1289 = vpack.c.bf16 %v1031, %v1030
        %v1290 = vpack.c.bf16 %v1033, %v1032
        %v1291 = vpack.c.bf16 %v1035, %v1034
        %s1292 = scalar_lea.vmem [#allocation3], 320
        %v1293 = vld [vmem:[%s1292] sm:$0xf]
        %v1294 = vld [vmem:[%s1292 + $0x4] sm:$0xf]
        %v1295 = vld [vmem:[%s1292 + $0x8] sm:$0xf]
        %v1296 = vld [vmem:[%s1292 + $0xc] sm:$0xf]
        %v1297 = vld [vmem:[%s1292 + $0x10] sm:$0xf]
        %v1298 = vld [vmem:[%s1292 + $0x14] sm:$0xf]
        %v1299 = vld [vmem:[%s1292 + $0x18] sm:$0xf]
        %v1300 = vld [vmem:[%s1292 + $0x1c] sm:$0xf]
        %v1301 = vld [vmem:[%s1292 + $0x20] sm:$0xf]
        %v1302 = vld [vmem:[%s1292 + $0x24] sm:$0xf]
        %v1303 = vld [vmem:[%s1292 + $0x28] sm:$0xf]
        %v1304 = vld [vmem:[%s1292 + $0x2c] sm:$0xf]
        %v1305 = vld [vmem:[%s1292 + $0x30] sm:$0xf]
        %v1306 = vld [vmem:[%s1292 + $0x34] sm:$0xf]
        %v1307 = vld [vmem:[%s1292 + $0x38] sm:$0xf]
        %v1308 = vld [vmem:[%s1292 + $0x3c] sm:$0xf]
        %v1325 = vunpack.c.l.b16 %v1293
        %v1326 = vunpack.c.l.b16 %v1294
        %v1327 = vunpack.c.l.b16 %v1295
        %v1328 = vunpack.c.l.b16 %v1296
        %v1329 = vunpack.c.l.b16 %v1297
        %v1330 = vunpack.c.l.b16 %v1298
        %v1331 = vunpack.c.l.b16 %v1299
        %v1332 = vunpack.c.l.b16 %v1300
        %v1333 = vunpack.c.l.b16 %v1301
        %v1334 = vunpack.c.l.b16 %v1302
        %v1335 = vunpack.c.l.b16 %v1303
        %v1336 = vunpack.c.l.b16 %v1304
        %v1337 = vunpack.c.l.b16 %v1305
        %v1338 = vunpack.c.l.b16 %v1306
        %v1339 = vunpack.c.l.b16 %v1307
        %v1340 = vunpack.c.l.b16 %v1308
        %v1341 = vpack.c.b16 %v1326, %v1325
        %v1342 = vpack.c.b16 %v1328, %v1327
        %v1343 = vpack.c.b16 %v1330, %v1329
        %v1344 = vpack.c.b16 %v1332, %v1331
        %v1345 = vpack.c.b16 %v1334, %v1333
        %v1346 = vpack.c.b16 %v1336, %v1335
        %v1347 = vpack.c.b16 %v1338, %v1337
        %v1348 = vpack.c.b16 %v1340, %v1339
        %1357 = vmatpush.bf16.msra.mxu0 %v1348
        %1358 = vmatpush.bf16.msra.mxu0 %v1347
        %1359 = vmatpush.bf16.msra.mxu0 %v1346
        %1360 = vmatpush.bf16.msra.mxu0 %v1345
        %1361 = vmatpush.bf16.msra.mxu0 %v1344
        %1362 = vmatpush.bf16.msra.mxu0 %v1343
        %1363 = vmatpush.bf16.msra.mxu0 %v1342
        %1364 = vmatpush.bf16.msra.mxu0 %v1341
        %1365 = vmatmul.bf16.gmra.mxu0 %v1288
        %v1366 = vpop.f32.mrf.mxu0
        %v1367 = vadd.f32 0.0, %v1366
        %v1368 = vpop.f32.mrf.mxu0
        %v1369 = vadd.f32 0.0, %v1368
        %1370 = vmatmul.bf16.gmra.mxu0 %v1289
        %v1371 = vpop.f32.mrf.mxu0
        %v1372 = vadd.f32 0.0, %v1371
        %v1373 = vpop.f32.mrf.mxu0
        %v1374 = vadd.f32 0.0, %v1373
        %1375 = vmatmul.bf16.gmra.mxu0 %v1290
        %v1376 = vpop.f32.mrf.mxu0
        %v1377 = vadd.f32 0.0, %v1376
        %v1378 = vpop.f32.mrf.mxu0
        %v1379 = vadd.f32 0.0, %v1378
        %1380 = vmatmul.bf16.gmra.mxu0 %v1291
        %v1381 = vpop.f32.mrf.mxu0
        %v1382 = vadd.f32 0.0, %v1381
        %v1383 = vpop.f32.mrf.mxu0
        %v1384 = vadd.f32 0.0, %v1383
        %1385 = vdwg.mxu0
        %v1386 = vadd.f32 %v1280, %v1367
        %v1387 = vadd.f32 %v1281, %v1369
        %v1388 = vadd.f32 %v1282, %v1372
        %v1389 = vadd.f32 %v1283, %v1374
        %v1390 = vadd.f32 %v1284, %v1377
        %v1391 = vadd.f32 %v1285, %v1379
        %v1392 = vadd.f32 %v1286, %v1382
        %v1393 = vadd.f32 %v1287, %v1384
        %v1395 = vrot.slane %v683, 7
        %v1397 = vsel %vm708, 0.0, %v1395
        %v1398 = vpack.c.bf16 %v711, %v710
        %v1399 = vpack.c.bf16 %v713, %v712
        %v1400 = vpack.c.bf16 %v715, %v714
        %v1401 = vpack.c.bf16 %v1397, %v716
        %s1402 = scalar_lea.vmem [#allocation3], 384
        %v1403 = vld [vmem:[%s1402] sm:$0xf]
        %v1404 = vld [vmem:[%s1402 + $0x4] sm:$0xf]
        %v1405 = vld [vmem:[%s1402 + $0x8] sm:$0xf]
        %v1406 = vld [vmem:[%s1402 + $0xc] sm:$0xf]
        %v1407 = vld [vmem:[%s1402 + $0x10] sm:$0xf]
        %v1408 = vld [vmem:[%s1402 + $0x14] sm:$0xf]
        %v1409 = vld [vmem:[%s1402 + $0x18] sm:$0xf]
        %v1410 = vld [vmem:[%s1402 + $0x1c] sm:$0xf]
        %v1411 = vld [vmem:[%s1402 + $0x20] sm:$0xf]
        %v1412 = vld [vmem:[%s1402 + $0x24] sm:$0xf]
        %v1413 = vld [vmem:[%s1402 + $0x28] sm:$0xf]
        %v1414 = vld [vmem:[%s1402 + $0x2c] sm:$0xf]
        %v1415 = vld [vmem:[%s1402 + $0x30] sm:$0xf]
        %v1416 = vld [vmem:[%s1402 + $0x34] sm:$0xf]
        %v1417 = vld [vmem:[%s1402 + $0x38] sm:$0xf]
        %v1418 = vld [vmem:[%s1402 + $0x3c] sm:$0xf]
        %v1435 = vunpack.c.l.b16 %v1403
        %v1436 = vunpack.c.l.b16 %v1404
        %v1437 = vunpack.c.l.b16 %v1405
        %v1438 = vunpack.c.l.b16 %v1406
        %v1439 = vunpack.c.l.b16 %v1407
        %v1440 = vunpack.c.l.b16 %v1408
        %v1441 = vunpack.c.l.b16 %v1409
        %v1442 = vunpack.c.l.b16 %v1410
        %v1443 = vunpack.c.l.b16 %v1411
        %v1444 = vunpack.c.l.b16 %v1412
        %v1445 = vunpack.c.l.b16 %v1413
        %v1446 = vunpack.c.l.b16 %v1414
        %v1447 = vunpack.c.l.b16 %v1415
        %v1448 = vunpack.c.l.b16 %v1416
        %v1449 = vunpack.c.l.b16 %v1417
        %v1450 = vunpack.c.l.b16 %v1418
        %v1451 = vpack.c.b16 %v1436, %v1435
        %v1452 = vpack.c.b16 %v1438, %v1437
        %v1453 = vpack.c.b16 %v1440, %v1439
        %v1454 = vpack.c.b16 %v1442, %v1441
        %v1455 = vpack.c.b16 %v1444, %v1443
        %v1456 = vpack.c.b16 %v1446, %v1445
        %v1457 = vpack.c.b16 %v1448, %v1447
        %v1458 = vpack.c.b16 %v1450, %v1449
        %1467 = vmatpush.bf16.msra.mxu0 %v1458
        %1468 = vmatpush.bf16.msra.mxu0 %v1457
        %1469 = vmatpush.bf16.msra.mxu0 %v1456
        %1470 = vmatpush.bf16.msra.mxu0 %v1455
        %1471 = vmatpush.bf16.msra.mxu0 %v1454
        %1472 = vmatpush.bf16.msra.mxu0 %v1453
        %1473 = vmatpush.bf16.msra.mxu0 %v1452
        %1474 = vmatpush.bf16.msra.mxu0 %v1451
        %1475 = vmatmul.bf16.gmra.mxu0 %v1398
        %v1476 = vpop.f32.mrf.mxu0
        %v1477 = vadd.f32 0.0, %v1476
        %v1478 = vpop.f32.mrf.mxu0
        %v1479 = vadd.f32 0.0, %v1478
        %1480 = vmatmul.bf16.gmra.mxu0 %v1399
        %v1481 = vpop.f32.mrf.mxu0
        %v1482 = vadd.f32 0.0, %v1481
        %v1483 = vpop.f32.mrf.mxu0
        %v1484 = vadd.f32 0.0, %v1483
        %1485 = vmatmul.bf16.gmra.mxu0 %v1400
        %v1486 = vpop.f32.mrf.mxu0
        %v1487 = vadd.f32 0.0, %v1486
        %v1488 = vpop.f32.mrf.mxu0
        %v1489 = vadd.f32 0.0, %v1488
        %1490 = vmatmul.bf16.gmra.mxu0 %v1401
        %v1491 = vpop.f32.mrf.mxu0
        %v1492 = vadd.f32 0.0, %v1491
        %v1493 = vpop.f32.mrf.mxu0
        %v1494 = vadd.f32 0.0, %v1493
        %1495 = vdwg.mxu0
        %v1496 = vadd.f32 %v1386, %v1477
        %v1497 = vadd.f32 %v1387, %v1479
        %v1498 = vadd.f32 %v1388, %v1482
        %v1499 = vadd.f32 %v1389, %v1484
        %v1500 = vadd.f32 %v1390, %v1487
        %v1501 = vadd.f32 %v1391, %v1489
        %v1502 = vadd.f32 %v1392, %v1492
        %v1503 = vadd.f32 %v1393, %v1494
        %v1504 = vpack.c.bf16 %v739, %v738
        %v1505 = vpack.c.bf16 %v741, %v740
        %v1506 = vpack.c.bf16 %v743, %v742
        %v1507 = vpack.c.bf16 %v745, %v744
        %s1508 = scalar_lea.vmem [#allocation3], 448
        %v1509 = vld [vmem:[%s1508] sm:$0xf]
        %v1510 = vld [vmem:[%s1508 + $0x4] sm:$0xf]
        %v1511 = vld [vmem:[%s1508 + $0x8] sm:$0xf]
        %v1512 = vld [vmem:[%s1508 + $0xc] sm:$0xf]
        %v1513 = vld [vmem:[%s1508 + $0x10] sm:$0xf]
        %v1514 = vld [vmem:[%s1508 + $0x14] sm:$0xf]
        %v1515 = vld [vmem:[%s1508 + $0x18] sm:$0xf]
        %v1516 = vld [vmem:[%s1508 + $0x1c] sm:$0xf]
        %v1517 = vld [vmem:[%s1508 + $0x20] sm:$0xf]
        %v1518 = vld [vmem:[%s1508 + $0x24] sm:$0xf]
        %v1519 = vld [vmem:[%s1508 + $0x28] sm:$0xf]
        %v1520 = vld [vmem:[%s1508 + $0x2c] sm:$0xf]
        %v1521 = vld [vmem:[%s1508 + $0x30] sm:$0xf]
        %v1522 = vld [vmem:[%s1508 + $0x34] sm:$0xf]
        %v1523 = vld [vmem:[%s1508 + $0x38] sm:$0xf]
        %v1524 = vld [vmem:[%s1508 + $0x3c] sm:$0xf]
        %v1541 = vunpack.c.l.b16 %v1509
        %v1542 = vunpack.c.l.b16 %v1510
        %v1543 = vunpack.c.l.b16 %v1511
        %v1544 = vunpack.c.l.b16 %v1512
        %v1545 = vunpack.c.l.b16 %v1513
        %v1546 = vunpack.c.l.b16 %v1514
        %v1547 = vunpack.c.l.b16 %v1515
        %v1548 = vunpack.c.l.b16 %v1516
        %v1549 = vunpack.c.l.b16 %v1517
        %v1550 = vunpack.c.l.b16 %v1518
        %v1551 = vunpack.c.l.b16 %v1519
        %v1552 = vunpack.c.l.b16 %v1520
        %v1553 = vunpack.c.l.b16 %v1521
        %v1554 = vunpack.c.l.b16 %v1522
        %v1555 = vunpack.c.l.b16 %v1523
        %v1556 = vunpack.c.l.b16 %v1524
        %v1557 = vpack.c.b16 %v1542, %v1541
        %v1558 = vpack.c.b16 %v1544, %v1543
        %v1559 = vpack.c.b16 %v1546, %v1545
        %v1560 = vpack.c.b16 %v1548, %v1547
        %v1561 = vpack.c.b16 %v1550, %v1549
        %v1562 = vpack.c.b16 %v1552, %v1551
        %v1563 = vpack.c.b16 %v1554, %v1553
        %v1564 = vpack.c.b16 %v1556, %v1555
        %1573 = vmatpush.bf16.msra.mxu0 %v1564
        %1574 = vmatpush.bf16.msra.mxu0 %v1563
        %1575 = vmatpush.bf16.msra.mxu0 %v1562
        %1576 = vmatpush.bf16.msra.mxu0 %v1561
        %1577 = vmatpush.bf16.msra.mxu0 %v1560
        %1578 = vmatpush.bf16.msra.mxu0 %v1559
        %1579 = vmatpush.bf16.msra.mxu0 %v1558
        %1580 = vmatpush.bf16.msra.mxu0 %v1557
        %1581 = vmatmul.bf16.gmra.mxu0 %v1504
        %v1582 = vpop.f32.mrf.mxu0
        %v1583 = vadd.f32 0.0, %v1582
        %v1584 = vpop.f32.mrf.mxu0
        %v1585 = vadd.f32 0.0, %v1584
        %1586 = vmatmul.bf16.gmra.mxu0 %v1505
        %v1587 = vpop.f32.mrf.mxu0
        %v1588 = vadd.f32 0.0, %v1587
        %v1589 = vpop.f32.mrf.mxu0
        %v1590 = vadd.f32 0.0, %v1589
        %1591 = vmatmul.bf16.gmra.mxu0 %v1506
        %v1592 = vpop.f32.mrf.mxu0
        %v1593 = vadd.f32 0.0, %v1592
        %v1594 = vpop.f32.mrf.mxu0
        %v1595 = vadd.f32 0.0, %v1594
        %1596 = vmatmul.bf16.gmra.mxu0 %v1507
        %v1597 = vpop.f32.mrf.mxu0
        %v1598 = vadd.f32 0.0, %v1597
        %v1599 = vpop.f32.mrf.mxu0
        %v1600 = vadd.f32 0.0, %v1599
        %1601 = vdwg.mxu0
        %v1602 = vadd.f32 %v1496, %v1583
        %v1603 = vadd.f32 %v1497, %v1585
        %v1604 = vadd.f32 %v1498, %v1588
        %v1605 = vadd.f32 %v1499, %v1590
        %v1606 = vadd.f32 %v1500, %v1593
        %v1607 = vadd.f32 %v1501, %v1595
        %v1608 = vadd.f32 %v1502, %v1598
        %v1609 = vadd.f32 %v1503, %v1600
        %v1610 = vpack.c.bf16 %v677, %v676
        %v1611 = vpack.c.bf16 %v679, %v678
        %v1612 = vpack.c.bf16 %v681, %v680
        %v1613 = vpack.c.bf16 %v683, %v682
        %s1614 = scalar_lea.vmem [#allocation3], 512
        %v1615 = vld [vmem:[%s1614] sm:$0xf]
        %v1616 = vld [vmem:[%s1614 + $0x4] sm:$0xf]
        %v1617 = vld [vmem:[%s1614 + $0x8] sm:$0xf]
        %v1618 = vld [vmem:[%s1614 + $0xc] sm:$0xf]
        %v1619 = vld [vmem:[%s1614 + $0x10] sm:$0xf]
        %v1620 = vld [vmem:[%s1614 + $0x14] sm:$0xf]
        %v1621 = vld [vmem:[%s1614 + $0x18] sm:$0xf]
        %v1622 = vld [vmem:[%s1614 + $0x1c] sm:$0xf]
        %v1623 = vld [vmem:[%s1614 + $0x20] sm:$0xf]
        %v1624 = vld [vmem:[%s1614 + $0x24] sm:$0xf]
        %v1625 = vld [vmem:[%s1614 + $0x28] sm:$0xf]
        %v1626 = vld [vmem:[%s1614 + $0x2c] sm:$0xf]
        %v1627 = vld [vmem:[%s1614 + $0x30] sm:$0xf]
        %v1628 = vld [vmem:[%s1614 + $0x34] sm:$0xf]
        %v1629 = vld [vmem:[%s1614 + $0x38] sm:$0xf]
        %v1630 = vld [vmem:[%s1614 + $0x3c] sm:$0xf]
        %v1647 = vunpack.c.l.b16 %v1615
        %v1648 = vunpack.c.l.b16 %v1616
        %v1649 = vunpack.c.l.b16 %v1617
        %v1650 = vunpack.c.l.b16 %v1618
        %v1651 = vunpack.c.l.b16 %v1619
        %v1652 = vunpack.c.l.b16 %v1620
        %v1653 = vunpack.c.l.b16 %v1621
        %v1654 = vunpack.c.l.b16 %v1622
        %v1655 = vunpack.c.l.b16 %v1623
        %v1656 = vunpack.c.l.b16 %v1624
        %v1657 = vunpack.c.l.b16 %v1625
        %v1658 = vunpack.c.l.b16 %v1626
        %v1659 = vunpack.c.l.b16 %v1627
        %v1660 = vunpack.c.l.b16 %v1628
        %v1661 = vunpack.c.l.b16 %v1629
        %v1662 = vunpack.c.l.b16 %v1630
        %v1663 = vpack.c.b16 %v1648, %v1647
        %v1664 = vpack.c.b16 %v1650, %v1649
        %v1665 = vpack.c.b16 %v1652, %v1651
        %v1666 = vpack.c.b16 %v1654, %v1653
        %v1667 = vpack.c.b16 %v1656, %v1655
        %v1668 = vpack.c.b16 %v1658, %v1657
        %v1669 = vpack.c.b16 %v1660, %v1659
        %v1670 = vpack.c.b16 %v1662, %v1661
        %1679 = vmatpush.bf16.msra.mxu0 %v1670
        %1680 = vmatpush.bf16.msra.mxu0 %v1669
        %1681 = vmatpush.bf16.msra.mxu0 %v1668
        %1682 = vmatpush.bf16.msra.mxu0 %v1667
        %1683 = vmatpush.bf16.msra.mxu0 %v1666
        %1684 = vmatpush.bf16.msra.mxu0 %v1665
        %1685 = vmatpush.bf16.msra.mxu0 %v1664
        %1686 = vmatpush.bf16.msra.mxu0 %v1663
        %1687 = vmatmul.bf16.gmra.mxu0 %v1610
        %v1688 = vpop.f32.mrf.mxu0
        %v1689 = vadd.f32 0.0, %v1688
        %v1690 = vpop.f32.mrf.mxu0
        %v1691 = vadd.f32 0.0, %v1690
        %1692 = vmatmul.bf16.gmra.mxu0 %v1611
        %v1693 = vpop.f32.mrf.mxu0
        %v1694 = vadd.f32 0.0, %v1693
        %v1695 = vpop.f32.mrf.mxu0
        %v1696 = vadd.f32 0.0, %v1695
        %1697 = vmatmul.bf16.gmra.mxu0 %v1612
        %v1698 = vpop.f32.mrf.mxu0
        %v1699 = vadd.f32 0.0, %v1698
        %v1700 = vpop.f32.mrf.mxu0
        %v1701 = vadd.f32 0.0, %v1700
        %1702 = vmatmul.bf16.gmra.mxu0 %v1613
        %v1703 = vpop.f32.mrf.mxu0
        %v1704 = vadd.f32 0.0, %v1703
        %v1705 = vpop.f32.mrf.mxu0
        %v1706 = vadd.f32 0.0, %v1705
        %1707 = vdwg.mxu0
        %v1708 = vadd.f32 %v1602, %v1689
        %v1709 = vadd.f32 %v1603, %v1691
        %v1710 = vadd.f32 %v1604, %v1694
        %v1711 = vadd.f32 %v1605, %v1696
        %v1712 = vadd.f32 %v1606, %v1699
        %v1713 = vadd.f32 %v1607, %v1701
        %v1714 = vadd.f32 %v1608, %v1704
        %v1715 = vadd.f32 %v1609, %v1706
        %v1716 = vld [vmem:[%s4] sm:$0x1]
        %v1718 = vperm.slane %v1716, 0
        %v1720 = vadd.f32 %v1708, %v1718
        %v1721 = vadd.f32 %v1709, %v1718
        %v1722 = vadd.f32 %v1710, %v1718
        %v1723 = vadd.f32 %v1711, %v1718
        %v1724 = vadd.f32 %v1712, %v1718
        %v1725 = vadd.f32 %v1713, %v1718
        %v1726 = vadd.f32 %v1714, %v1718
        %v1727 = vadd.f32 %v1715, %v1718
        %v1728 = vmax.f32 %v1720, 0.0
        %v1729 = vmax.f32 %v1721, 0.0
        %v1730 = vmax.f32 %v1722, 0.0
        %v1731 = vmax.f32 %v1723, 0.0
        %v1732 = vmax.f32 %v1724, 0.0
        %v1733 = vmax.f32 %v1725, 0.0
        %v1734 = vmax.f32 %v1726, 0.0
        %v1735 = vmax.f32 %v1727, 0.0
        %v1736 = vpack.c.bf16 %v1729, %v1728
        %v1737 = vpack.c.bf16 %v1731, %v1730
        %v1738 = vpack.c.bf16 %v1733, %v1732
        %v1739 = vpack.c.bf16 %v1735, %v1734
        %v1740 = vld [vmem:[%s5] sm:$0xf]
        %v1741 = vld [vmem:[%s5 + $0x4] sm:$0xf]
        %v1742 = vld [vmem:[%s5 + $0x8] sm:$0xf]
        %v1743 = vld [vmem:[%s5 + $0xc] sm:$0xf]
        %v1744 = vld [vmem:[%s5 + $0x10] sm:$0xf]
        %v1745 = vld [vmem:[%s5 + $0x14] sm:$0xf]
        %v1746 = vld [vmem:[%s5 + $0x18] sm:$0xf]
        %v1747 = vld [vmem:[%s5 + $0x1c] sm:$0xf]
        %v1748 = vld [vmem:[%s5 + $0x20] sm:$0xf]
        %v1749 = vld [vmem:[%s5 + $0x24] sm:$0xf]
        %v1750 = vld [vmem:[%s5 + $0x28] sm:$0xf]
        %v1751 = vld [vmem:[%s5 + $0x2c] sm:$0xf]
        %v1752 = vld [vmem:[%s5 + $0x30] sm:$0xf]
        %v1753 = vld [vmem:[%s5 + $0x34] sm:$0xf]
        %v1754 = vld [vmem:[%s5 + $0x38] sm:$0xf]
        %v1755 = vld [vmem:[%s5 + $0x3c] sm:$0xf]
        %v1756 = vld [vmem:[%s6] sm:$0x1]
        %v1758 = vperm.slane %v1756, 0
        %v1776 = vunpack.c.l.b16 %v1740
        %v1777 = vunpack.c.l.b16 %v1741
        %v1778 = vunpack.c.l.b16 %v1742
        %v1779 = vunpack.c.l.b16 %v1743
        %v1780 = vunpack.c.l.b16 %v1744
        %v1781 = vunpack.c.l.b16 %v1745
        %v1782 = vunpack.c.l.b16 %v1746
        %v1783 = vunpack.c.l.b16 %v1747
        %v1784 = vunpack.c.l.b16 %v1748
        %v1785 = vunpack.c.l.b16 %v1749
        %v1786 = vunpack.c.l.b16 %v1750
        %v1787 = vunpack.c.l.b16 %v1751
        %v1788 = vunpack.c.l.b16 %v1752
        %v1789 = vunpack.c.l.b16 %v1753
        %v1790 = vunpack.c.l.b16 %v1754
        %v1791 = vunpack.c.l.b16 %v1755
        %v1792 = vpack.c.b16 %v1777, %v1776
        %v1793 = vpack.c.b16 %v1779, %v1778
        %v1794 = vpack.c.b16 %v1781, %v1780
        %v1795 = vpack.c.b16 %v1783, %v1782
        %v1796 = vpack.c.b16 %v1785, %v1784
        %v1797 = vpack.c.b16 %v1787, %v1786
        %v1798 = vpack.c.b16 %v1789, %v1788
        %v1799 = vpack.c.b16 %v1791, %v1790
        %1808 = vmatpush.bf16.msra.mxu0 %v1799
        %1809 = vmatpush.bf16.msra.mxu0 %v1798
        %1810 = vmatpush.bf16.msra.mxu0 %v1797
        %1811 = vmatpush.bf16.msra.mxu0 %v1796
        %1812 = vmatpush.bf16.msra.mxu0 %v1795
        %1813 = vmatpush.bf16.msra.mxu0 %v1794
        %1814 = vmatpush.bf16.msra.mxu0 %v1793
        %1815 = vmatpush.bf16.msra.mxu0 %v1792
        %1816 = vmatmul.bf16.gmra.mxu0 %v1736
        %v1817 = vpop.f32.mrf.mxu0
        %v1818 = vadd.f32 %v1758, %v1817
        %v1819 = vpop.f32.mrf.mxu0
        %v1820 = vadd.f32 %v1758, %v1819
        %1821 = vmatmul.bf16.gmra.mxu0 %v1737
        %v1822 = vpop.f32.mrf.mxu0
        %v1823 = vadd.f32 %v1758, %v1822
        %v1824 = vpop.f32.mrf.mxu0
        %v1825 = vadd.f32 %v1758, %v1824
        %1826 = vmatmul.bf16.gmra.mxu0 %v1738
        %v1827 = vpop.f32.mrf.mxu0
        %v1828 = vadd.f32 %v1758, %v1827
        %v1829 = vpop.f32.mrf.mxu0
        %v1830 = vadd.f32 %v1758, %v1829
        %1831 = vmatmul.bf16.gmra.mxu0 %v1739
        %v1832 = vpop.f32.mrf.mxu0
        %v1833 = vadd.f32 %v1758, %v1832
        %v1834 = vpop.f32.mrf.mxu0
        %v1835 = vadd.f32 %v1758, %v1834
        %1836 = vdwg.mxu0
        %v1837 = vld [vmem:[%s7] sm:$0xf]
        %v1838 = vld [vmem:[%s7 + $0x4] sm:$0xf]
        %v1839 = vld [vmem:[%s8] sm:$0x1]
        %v1841 = vperm.slane %v1839, 0
        %v1845 = vunpack.c.l.b16 %v1837
        %v1846 = vunpack.c.l.b16 %v1838
        %v1847 = vpack.c.b16 %v1846, %v1845
        %1849 = vmatpush.bf16.msra.mxu0 0
        %1850 = vmatpush.bf16.msra.mxu0 0
        %1851 = vmatpush.bf16.msra.mxu0 0
        %1852 = vmatpush.bf16.msra.mxu0 0
        %1853 = vmatpush.bf16.msra.mxu0 0
        %1854 = vmatpush.bf16.msra.mxu0 0
        %1855 = vmatpush.bf16.msra.mxu0 0
        %1856 = vmatpush.bf16.msra.mxu0 %v1847
        %1857 = vmatmul.bf16.gmra.mxu0 %v475
        %v1858 = vpop.f32.mrf.mxu0
        %v1859 = vadd.f32 %v1841, %v1858
        %v1860 = vpop.f32.mrf.mxu0
        %v1861 = vadd.f32 %v1841, %v1860
        %1862 = vmatmul.bf16.gmra.mxu0 %v478
        %v1863 = vpop.f32.mrf.mxu0
        %v1864 = vadd.f32 %v1841, %v1863
        %v1865 = vpop.f32.mrf.mxu0
        %v1866 = vadd.f32 %v1841, %v1865
        %1867 = vmatmul.bf16.gmra.mxu0 %v481
        %v1868 = vpop.f32.mrf.mxu0
        %v1869 = vadd.f32 %v1841, %v1868
        %v1870 = vpop.f32.mrf.mxu0
        %v1871 = vadd.f32 %v1841, %v1870
        %1872 = vmatmul.bf16.gmra.mxu0 %v484
        %v1873 = vpop.f32.mrf.mxu0
        %v1874 = vadd.f32 %v1841, %v1873
        %v1875 = vpop.f32.mrf.mxu0
        %v1876 = vadd.f32 %v1841, %v1875
        %1877 = vdwg.mxu0
        %v1878 = vadd.f32 %v1818, %v1859
        %v1879 = vadd.f32 %v1820, %v1861
        %v1880 = vadd.f32 %v1823, %v1864
        %v1881 = vadd.f32 %v1825, %v1866
        %v1882 = vadd.f32 %v1828, %v1869
        %v1883 = vadd.f32 %v1830, %v1871
        %v1884 = vadd.f32 %v1833, %v1874
        %v1885 = vadd.f32 %v1835, %v1876
        %v1886 = vmax.f32 %v1878, 0.0
        %v1887 = vmax.f32 %v1879, 0.0
        %v1888 = vmax.f32 %v1880, 0.0
        %v1889 = vmax.f32 %v1881, 0.0
        %v1890 = vmax.f32 %v1882, 0.0
        %v1891 = vmax.f32 %v1883, 0.0
        %v1892 = vmax.f32 %v1884, 0.0
        %v1893 = vmax.f32 %v1885, 0.0
        %1894 = vst [vmem:[%s342] sm:$0xff] %v1886
        %1895 = vst [vmem:[%s342 + $0x8] sm:$0xff] %v1887
        %1896 = vst [vmem:[%s342 + $0x10] sm:$0xff] %v1888
        %1897 = vst [vmem:[%s342 + $0x18] sm:$0xff] %v1889
        %1898 = vst [vmem:[%s342 + $0x20] sm:$0xff] %v1890
        %1899 = vst [vmem:[%s342 + $0x28] sm:$0xff] %v1891
        %1900 = vst [vmem:[%s342 + $0x30] sm:$0xff] %v1892
        %1901 = vst [vmem:[%s342 + $0x38] sm:$0xff] %v1893
        %s1902 = sand.u32 %s226, 1
        %s1903 = scalar_lea.sflag [#allocation5], %s1902
        %s1904 = sand.u32 %s226, 1
        %s1905 = smul.addr %s1904, 64
        %s1906 = scalar_lea.vmem [#allocation6], %s1905
        // Predicated region
        $region61: #{tpu_custom_call.1} parent=55 // pred_check
          %p1907 = pneg %p236
        $region62: #{tpu_custom_call.1} parent=55 // pred_check_branch
          %1909 = sbr.rel (%p1907) target = $region64
        $region63: #{tpu_custom_call.1} parent=55 // pred_region
          %1911 = vsyncadd %s1903, 0
          %s1912 = smul.addr %s24, 8
          %s1913 = smul.addr %s1912, 8
          %s1914 = scalar_lea.hbm %s9, %s1913
          %s1915 = sshll.u32 %s1906, 4
          %s1916 = int_to_ptr.vmem [resolvable:$true] %s1915
          %s1917 = sshll.u32 %s1914, 4
          %s1918 = int_to_ptr.hbm [resolvable:$true] %s1917
          %1923 = dma.vmem_to_hbm [thread:$0]  %s1916, 1024, %s1918, %s1903, 128, 128, 8
        $region64: #{tpu_custom_call.1} parent=55 // pred_fallthru
          _
      $region56: #{tpu_custom_call.1} parent=5 // pred_fallthru
        _
      %p1924 = scmp.le.s32.totalorder 2, %s19
      // Predicated region
      $region65: #{tpu_custom_call.1} parent=5 // pred_check
        %p1925 = pneg %p1924
      $region66: #{tpu_custom_call.1} parent=5 // pred_check_branch
        %1927 = sbr.rel (%p1925) target = $region68
      $region67: #{tpu_custom_call.1} parent=5 // pred_region
        %s1928 = ssub.s32 %s19, 2
        // Predicated region
        $region69: #{tpu_custom_call.1} parent=67 // pred_check
          %p1929 = pneg %p242
        $region70: #{tpu_custom_call.1} parent=67 // pred_check_branch
          %1931 = sbr.rel (%p1929) target = $region72
        $region71: #{tpu_custom_call.1} parent=67 // pred_region
          %s1932 = sand.u32 %s227, 1
          %s1933 = scalar_lea.sflag [#allocation5], %s1932
          %s1934 = sand.u32 %s227, 1
          %s1935 = smul.addr %s1934, 64
          %s1936 = scalar_lea.vmem [#allocation6], %s1935
          %1938 = dma.done %s1933, 1024
        $region72: #{tpu_custom_call.1} parent=67 // pred_fallthru
          _
      $region68: #{tpu_custom_call.1} parent=5 // pred_fallthru
        _
    $region6: #{tpu_custom_call.1} parent=1 // loop_footer
      %s23 = sadd.s32 1, %s19
    $region7: #{tpu_custom_call.1} parent=1 // loop_footer_branch
      %18 = sbr.rel target = $region3
    $region8: #{tpu_custom_call.1} parent=1 // loop_exit
      _
    %1939 = vsyncpa [#allocation4], 1
    %s1940 = scalar_lea.sflag [#allocation4], 1
    %1941 = vsyncpa %s1940, 1
    %1942 = vsyncpa [#allocation5], 1
    %s1943 = scalar_lea.sflag [#allocation5], 1
    %1944 = vsyncpa %s1943, 1

</llo_original>
